<compile_context>
chip_gen: v5e
topology: v5e:2x2
jax: 0.10.0
libtpu: 0.0.40
codegen_flags: <defaults>
</compile_context>

<pallas_src>
import math

import jax
import jax.numpy as jnp
from jax.experimental import pallas as pl
from jax.experimental.pallas import tpu as pltpu


FREQ_EMB_SIZE = 256   # frequency_embedding_size in TimeEmbedding (even)
LANE = 128
SUBLANE = 8


# ---------------------------------------------------------------------------
# Kernel
# ---------------------------------------------------------------------------
def _time_linear_kernel(
    t_ref,      # (TN, 1)          f32 timesteps
    freqs_ref,  # (1, half)        f32 frequencies
    x_ref,      # (TN, din)        f32 input tile
    wfc_ref,    # (din, doutp)     bf16 fc weight (pre-transposed)
    bfc_ref,    # (1, doutp)       f32 fc bias
    w1_ref,     # (2*half, doutp)  bf16 time-MLP layer-1 weight
    b1_ref,     # (1, doutp)       f32
    w2_ref,     # (doutp, doutp)   bf16 time-MLP layer-2 weight
    b2_ref,     # (1, doutp)       f32
    out_ref,    # (TN, doutp)      output tile
):
    cdt = wfc_ref.dtype

    # Sinusoidal timestep embedding (EUP/VPU path stays f32; only MXU inputs
    # are cast down).  cos/sin halves are lane-aligned (half % 128 == 0), so
    # the concat is cheap placement and feeds a single K=2*half MXU matmul.
    args = t_ref[...] * freqs_ref[...]                       # (TN, half) f32
    emb = jnp.concatenate([jnp.cos(args), jnp.sin(args)], axis=-1).astype(cdt)

    # Time MLP: Linear -> SiLU -> Linear, f32 accumulation throughout.
    h = jnp.dot(emb, w1_ref[...], preferred_element_type=jnp.float32) + b1_ref[...]
    h = h * jax.nn.sigmoid(h)                                # SiLU in f32
    alpha = jnp.dot(h.astype(cdt), w2_ref[...],
                    preferred_element_type=jnp.float32) + b2_ref[...]

    # fc(x): in-register f32->bf16 cast, f32 accumulate, lane-dense store.
    xfc = jnp.dot(x_ref[...].astype(cdt), wfc_ref[...],
                  preferred_element_type=jnp.float32) + bfc_ref[...]

    out_ref[...] = (alpha * xfc).astype(out_ref.dtype)


# ---------------------------------------------------------------------------
# Helpers
# ---------------------------------------------------------------------------
def _round_up(v, m):
    return ((v + m - 1) // m) * m


def _nbytes(shape, dtype):
    n = 1
    for s in shape:
        n *= s
    return n * jnp.dtype(dtype).itemsize


def _vmem_capacity_bytes():
    """Physical per-core VMEM (128 MiB on v5e/v6e, 64 MiB on v7x)."""
    try:
        return int(pltpu.get_tpu_info().vmem_capacity_bytes)
    except Exception:
        return 64 * 1024 * 1024   # conservative fallback


def prepare_params(params, *, compute_dtype=jnp.bfloat16):
    """One-time weight preprocessing (hoisted out of the forward pass): pad
    every dim_out-sized axis to a multiple of 128 lanes (lane-dense stores;
    zero columns/rows contribute exactly zero) and cast matmul weights to the
    MXU dtype.  Biases and frequencies stay f32."""
    dout = params["wfc"].shape[1]
    doutp = _round_up(dout, LANE)
    po = doutp - dout
    f32 = jnp.float32
    pad_cols = lambda a: jnp.pad(a, ((0, 0), (0, po)))
    return dict(
        wfc=pad_cols(params["wfc"]).astype(compute_dtype),
        bfc=pad_cols(params["bfc"]).astype(f32),
        w1=pad_cols(params["w1"]).astype(compute_dtype),
        b1=pad_cols(params["b1"]).astype(f32),
        w2=jnp.pad(params["w2"], ((0, po), (0, po))).astype(compute_dtype),
        b2=pad_cols(params["b2"]).astype(f32),
        freqs=params["freqs"].astype(f32),
        dim_out=dout,   # python int, used only for the final (optional) slice
    )


# ---------------------------------------------------------------------------
# Forward
# ---------------------------------------------------------------------------
def time_linear_forward(x, t, prepared, *, tile_n=None, out_dtype=jnp.float32):
    """x: (N, dim_in) f32, t: (N,) timesteps, prepared: prepare_params(...).
    Returns (N, dim_out) in out_dtype."""
    N, din = x.shape
    dout = prepared["dim_out"]
    doutp = prepared["wfc"].shape[1]
    half = prepared["freqs"].shape[1]
    k1 = prepared["w1"].shape[0]          # 2 * half
    cdt = prepared["wfc"].dtype
    f32 = jnp.float32
    # TODO(synk): odd frequency_embedding_size (PyTorch zero-pads one column)
    # is not handled; the module default F=256 is even.
    # TODO(synk): batch-constant-t fast path (compute alpha once, broadcast)
    # and a column-tiled w2 path for very large dim_out (>~4k on v7x) are not
    # implemented; this version keeps all weights VMEM-resident.

    vmem_cap = _vmem_capacity_bytes()
    if tile_n is None:
        tile_n = 512 if vmem_cap >= (96 << 20) else 256   # bigger tiles on 128 MiB chips

    # Batch tiling: tn rows per grid step; pl.cdiv masks the ragged tail so no
    # wrapper-side row padding / extra copy of x is needed.
    tn = min(tile_n, _round_up(N, SUBLANE))
    grid = (pl.cdiv(N, tn),)

    t2d = t.astype(f32).reshape(N, 1)
    operands = (t2d, prepared["freqs"], x,
                prepared["wfc"], prepared["bfc"],
                prepared["w1"], prepared["b1"],
                prepared["w2"], prepared["b2"])

    # VMEM accounting: streamed tiles are double-buffered by the pipeline;
    # resident weights are single-buffered (pl.Buffered(1)).
    tile_bytes = (_nbytes((tn, din), x.dtype)
                  + _nbytes((tn, 1), f32)
                  + _nbytes((tn, doutp), out_dtype))
    weight_bytes = (_nbytes((din, doutp), cdt)
                    + _nbytes((k1, doutp), cdt)
                    + _nbytes((doutp, doutp), cdt)
                    + 4 * _nbytes((1, doutp), f32)
                    + _nbytes((1, half), f32))

    cost = pl.CostEstimate(
        flops=2 * N * (din + k1 + doutp) * doutp,
        transcendentals=N * (k1 + doutp),
        bytes_accessed=int(sum(_nbytes(a.shape, a.dtype) for a in operands)
                           + _nbytes((N, doutp), out_dtype)),
    )

    def build(single_buffer_weights):
        def resident(shape):
            kw = ({"pipeline_mode": pl.Buffered(1)}
                  if single_buffer_weights else {})
            return pl.BlockSpec(shape, lambda i, _nd=len(shape): (0,) * _nd, **kw)

        in_specs = [
            pl.BlockSpec((tn, 1), lambda i: (i, 0)),       # t    (streamed)
            resident((1, half)),                           # freqs
            pl.BlockSpec((tn, din), lambda i: (i, 0)),     # x    (streamed)
            resident((din, doutp)),                        # wfc
            resident((1, doutp)),                          # bfc
            resident((k1, doutp)),                         # w1
            resident((1, doutp)),                          # b1
            resident((doutp, doutp)),                      # w2
            resident((1, doutp)),                          # b2
        ]
        out_spec = pl.BlockSpec((tn, doutp), lambda i: (i, 0))

        w_mult = 1 if single_buffer_weights else 2
        vmem_limit = int(min(max(vmem_cap - (4 << 20), 32 << 20),
                             2 * tile_bytes + w_mult * weight_bytes + (4 << 20)))

        return pl.pallas_call(
            _time_linear_kernel,
            out_shape=jax.ShapeDtypeStruct((N, doutp), out_dtype),
            grid=grid,
            in_specs=in_specs,
            out_specs=out_spec,
            compiler_params=pltpu.CompilerParams(
                dimension_semantics=("parallel",),
                vmem_limit_bytes=vmem_limit,
            ),
            cost_estimate=cost,
        )

    try:
        out = build(True)(*operands)
    except Exception:
        # Fallback for jax versions without BlockSpec.pipeline_mode: default
        # double-buffered resident weights (correct, just uses more VMEM).
        out = build(False)(*operands)

    return out if doutp == dout else out[:, :dout]


# ---------------------------------------------------------------------------
# Parameters / reference
# ---------------------------------------------------------------------------
def init_params(key, dim_in, dim_out, freq_size=FREQ_EMB_SIZE):
    """Deterministic synthetic parameters (PyTorch-like uniform fan-in init)."""
    ks = jax.random.split(key, 6)

    def linear(kw, kb, fan_in, fan_out):
        bound = 1.0 / math.sqrt(fan_in)
        # stored pre-transposed: (fan_in, fan_out)
        w = jax.random.uniform(kw, (fan_in, fan_out), jnp.float32, -bound, bound)
        b = jax.random.uniform(kb, (1, fan_out), jnp.float32, -bound, bound)
        return w, b

    wfc, bfc = linear(ks[0], ks[1], dim_in, dim_out)
    w1, b1 = linear(ks[2], ks[3], freq_size, dim_out)
    w2, b2 = linear(ks[4], ks[5], dim_out, dim_out)

    half = freq_size // 2
    freqs = jnp.exp(
        -math.log(10000.0) * jnp.arange(half, dtype=jnp.float32) / half
    ).reshape(1, half)

    return dict(wfc=wfc, bfc=bfc, w1=w1, b1=b1, w2=w2, b2=b2, freqs=freqs)


def reference_forward(x, t, params, compute_dtype=None):
    """Pure-JAX reference mirroring the PyTorch module.  If compute_dtype is
    given, matmul inputs are round-tripped through it (f32 accumulation) to
    mirror the kernel's low-precision path."""
    if compute_dtype is None:
        cast = lambda a: a
    else:
        cast = lambda a: a.astype(compute_dtype).astype(jnp.float32)

    t = t.astype(jnp.float32)
    args = t[:, None] * params["freqs"][0][None, :]
    emb = jnp.concatenate([jnp.cos(args), jnp.sin(args)], axis=-1)
    h = cast(emb) @ cast(params["w1"]) + params["b1"]
    h = h * jax.nn.sigmoid(h)
    alpha = cast(h) @ cast(params["w2"]) + params["b2"]
    xfc = cast(x) @ cast(params["wfc"]) + params["bfc"]
    return alpha * xfc


if __name__ == "__main__":
    N, dim_in, dim_out, num_timesteps = 8, 16, 32, 1000

    key = jax.random.PRNGKey(0)
    k_param, k_x, k_t = jax.random.split(key, 3)

    params = init_params(k_param, dim_in, dim_out)
    prepared = prepare_params(params)            # one-time pad + bf16 cast
    x = jax.random.normal(k_x, (N, dim_in), jnp.float32)
    t = jax.random.randint(k_t, (N,), 0, num_timesteps).astype(jnp.float32)

    out = jax.block_until_ready(time_linear_forward(x, t, prepared))
    assert out.shape == (N, dim_out)

    # Strict check vs a reference mirroring the bf16 matmul-input casts.
    ref_mirror = reference_forward(x, t, params, compute_dtype=jnp.bfloat16)
    assert jnp.allclose(out, ref_mirror, atol=5e-3, rtol=5e-3), \
        "mismatch vs bf16-mirrored reference"

    # Loose check vs the full-f32 reference (bounds bf16 rounding error).
    ref_f32 = reference_forward(x, t, params)
    assert jnp.allclose(out, ref_f32, atol=2e-2, rtol=2e-2), \
        "mismatch vs f32 reference"

    print("KERNEL_OK")
</pallas_src>

<mosaic_0001>
module attributes {stable_mosaic.version = 11 : i64} {
  func.func @_time_linear_kernel(%arg0: i32, %arg1: memref<8x1xf32, #tpu.memory_space<vmem>>, %arg2: memref<1x128xf32, #tpu.memory_space<vmem>>, %arg3: memref<8x16xf32, #tpu.memory_space<vmem>>, %arg4: memref<16x128xbf16, #tpu.memory_space<vmem>>, %arg5: memref<1x128xf32, #tpu.memory_space<vmem>>, %arg6: memref<256x128xbf16, #tpu.memory_space<vmem>>, %arg7: memref<1x128xf32, #tpu.memory_space<vmem>>, %arg8: memref<128x128xbf16, #tpu.memory_space<vmem>>, %arg9: memref<1x128xf32, #tpu.memory_space<vmem>>, %arg10: memref<8x128xf32, #tpu.memory_space<vmem>>) attributes {dimension_semantics = [#tpu.dimension_semantics<parallel>], iteration_bounds = array<i64: 1>, scalar_prefetch = 0 : i64, scratch_operands = 0 : i64, tpu.core_type = #tpu.core_type<tc>, window_params = [{transform_indices = @transform_0, window_bounds = array<i64: 8, 1>}, {pipeline_mode = #tpu.pipeline_mode<synchronous>, transform_indices = @transform_1, window_bounds = array<i64: 1, 128>}, {transform_indices = @transform_2, window_bounds = array<i64: 8, 16>}, {pipeline_mode = #tpu.pipeline_mode<synchronous>, transform_indices = @transform_3, window_bounds = array<i64: 16, 128>}, {pipeline_mode = #tpu.pipeline_mode<synchronous>, transform_indices = @transform_4, window_bounds = array<i64: 1, 128>}, {pipeline_mode = #tpu.pipeline_mode<synchronous>, transform_indices = @transform_5, window_bounds = array<i64: 256, 128>}, {pipeline_mode = #tpu.pipeline_mode<synchronous>, transform_indices = @transform_6, window_bounds = array<i64: 1, 128>}, {pipeline_mode = #tpu.pipeline_mode<synchronous>, transform_indices = @transform_7, window_bounds = array<i64: 128, 128>}, {pipeline_mode = #tpu.pipeline_mode<synchronous>, transform_indices = @transform_8, window_bounds = array<i64: 1, 128>}, {transform_indices = @transform_9, window_bounds = array<i64: 8, 128>}]} {
    %c0 = arith.constant 0 : index
    %c0_0 = arith.constant 0 : index
    %0 = vector.load %arg1[%c0, %c0_0] : memref<8x1xf32, #tpu.memory_space<vmem>>, vector<8x1xf32>
    %c0_1 = arith.constant 0 : index
    %c0_2 = arith.constant 0 : index
    %1 = vector.load %arg2[%c0_1, %c0_2] : memref<1x128xf32, #tpu.memory_space<vmem>>, vector<1x128xf32>
    %2 = vector.broadcast %0 : vector<8x1xf32> to vector<8x128xf32>
    %3 = vector.broadcast %1 : vector<1x128xf32> to vector<8x128xf32>
    %4 = arith.mulf %2, %3 : vector<8x128xf32>
    %5 = math.cos %4 : vector<8x128xf32>
    %6 = math.sin %4 : vector<8x128xf32>
    %7 = tpu.concatenate %5, %6 in 1 : vector<8x128xf32>, vector<8x128xf32> -> vector<8x256xf32>
    %8 = arith.truncf %7 : vector<8x256xf32> to vector<8x256xbf16>
    %c0_3 = arith.constant 0 : index
    %c0_4 = arith.constant 0 : index
    %9 = vector.load %arg6[%c0_3, %c0_4] : memref<256x128xbf16, #tpu.memory_space<vmem>>, vector<256x128xbf16>
    %cst = arith.constant dense<0.000000e+00> : vector<8x128xf32>
    %10 = tpu.matmul %8, %9, %cst {dimension_numbers = #tpu.dot_dimension_numbers<[1], [0], [0], [1], [0, 0, 1, 1], [], []>} : vector<8x256xbf16>, vector<256x128xbf16>, vector<8x128xf32> -> vector<8x128xf32>
    %c0_5 = arith.constant 0 : index
    %c0_6 = arith.constant 0 : index
    %11 = vector.load %arg7[%c0_5, %c0_6] : memref<1x128xf32, #tpu.memory_space<vmem>>, vector<1x128xf32>
    %12 = vector.broadcast %11 : vector<1x128xf32> to vector<8x128xf32>
    %13 = arith.addf %10, %12 : vector<8x128xf32>
    %14 = arith.negf %13 : vector<8x128xf32>
    %15 = math.exp %14 : vector<8x128xf32>
    %cst_7 = arith.constant 1.000000e+00 : f32
    %16 = vector.broadcast %cst_7 : f32 to vector<8x128xf32>
    %17 = arith.addf %16, %15 : vector<8x128xf32>
    %18 = arith.divf %16, %17 : vector<8x128xf32>
    %19 = arith.mulf %13, %18 : vector<8x128xf32>
    %20 = arith.truncf %19 : vector<8x128xf32> to vector<8x128xbf16>
    %c0_8 = arith.constant 0 : index
    %c0_9 = arith.constant 0 : index
    %21 = vector.load %arg8[%c0_8, %c0_9] : memref<128x128xbf16, #tpu.memory_space<vmem>>, vector<128x128xbf16>
    %cst_10 = arith.constant dense<0.000000e+00> : vector<8x128xf32>
    %22 = tpu.matmul %20, %21, %cst_10 {dimension_numbers = #tpu.dot_dimension_numbers<[1], [0], [0], [1], [0, 0, 1, 1], [], []>} : vector<8x128xbf16>, vector<128x128xbf16>, vector<8x128xf32> -> vector<8x128xf32>
    %c0_11 = arith.constant 0 : index
    %c0_12 = arith.constant 0 : index
    %23 = vector.load %arg9[%c0_11, %c0_12] : memref<1x128xf32, #tpu.memory_space<vmem>>, vector<1x128xf32>
    %24 = vector.broadcast %23 : vector<1x128xf32> to vector<8x128xf32>
    %25 = arith.addf %22, %24 : vector<8x128xf32>
    %c0_13 = arith.constant 0 : index
    %c0_14 = arith.constant 0 : index
    %26 = vector.load %arg3[%c0_13, %c0_14] : memref<8x16xf32, #tpu.memory_space<vmem>>, vector<8x16xf32>
    %27 = arith.truncf %26 : vector<8x16xf32> to vector<8x16xbf16>
    %c0_15 = arith.constant 0 : index
    %c0_16 = arith.constant 0 : index
    %28 = vector.load %arg4[%c0_15, %c0_16] : memref<16x128xbf16, #tpu.memory_space<vmem>>, vector<16x128xbf16>
    %cst_17 = arith.constant dense<0.000000e+00> : vector<8x128xf32>
    %29 = tpu.matmul %27, %28, %cst_17 {dimension_numbers = #tpu.dot_dimension_numbers<[1], [0], [0], [1], [0, 0, 1, 1], [], []>} : vector<8x16xbf16>, vector<16x128xbf16>, vector<8x128xf32> -> vector<8x128xf32>
    %c0_18 = arith.constant 0 : index
    %c0_19 = arith.constant 0 : index
    %30 = vector.load %arg5[%c0_18, %c0_19] : memref<1x128xf32, #tpu.memory_space<vmem>>, vector<1x128xf32>
    %31 = vector.broadcast %30 : vector<1x128xf32> to vector<8x128xf32>
    %32 = arith.addf %29, %31 : vector<8x128xf32>
    %33 = arith.mulf %25, %32 : vector<8x128xf32>
    %c0_20 = arith.constant 0 : index
    %c0_21 = arith.constant 0 : index
    %34 = vector.load %arg10[%c0_20, %c0_21] : memref<8x128xf32, #tpu.memory_space<vmem>>, vector<8x128xf32>
    tpu.vector_store %arg10[%c0_20, %c0_21], %33 {strides = array<i32>} : memref<8x128xf32, #tpu.memory_space<vmem>>, vector<8x128xf32>,
    return
  }
  func.func @transform_0(%arg0: i32) -> (i32, i32) {
    %c0_i32 = arith.constant 0 : i32
    %c0_i32_0 = arith.constant 0 : i32
    return %arg0, %c0_i32 : i32, i32
  }
  func.func @transform_1(%arg0: i32) -> (i32, i32) {
    %c0_i32 = arith.constant 0 : i32
    %c0_i32_0 = arith.constant 0 : i32
    %c0_i32_1 = arith.constant 0 : i32
    return %c0_i32, %c0_i32_0 : i32, i32
  }
  func.func @transform_2(%arg0: i32) -> (i32, i32) {
    %c0_i32 = arith.constant 0 : i32
    %c0_i32_0 = arith.constant 0 : i32
    return %arg0, %c0_i32 : i32, i32
  }
  func.func @transform_3(%arg0: i32) -> (i32, i32) {
    %c0_i32 = arith.constant 0 : i32
    %c0_i32_0 = arith.constant 0 : i32
    %c0_i32_1 = arith.constant 0 : i32
    return %c0_i32, %c0_i32_0 : i32, i32
  }
  func.func @transform_4(%arg0: i32) -> (i32, i32) {
    %c0_i32 = arith.constant 0 : i32
    %c0_i32_0 = arith.constant 0 : i32
    %c0_i32_1 = arith.constant 0 : i32
    return %c0_i32, %c0_i32_0 : i32, i32
  }
  func.func @transform_5(%arg0: i32) -> (i32, i32) {
    %c0_i32 = arith.constant 0 : i32
    %c0_i32_0 = arith.constant 0 : i32
    %c0_i32_1 = arith.constant 0 : i32
    return %c0_i32, %c0_i32_0 : i32, i32
  }
  func.func @transform_6(%arg0: i32) -> (i32, i32) {
    %c0_i32 = arith.constant 0 : i32
    %c0_i32_0 = arith.constant 0 : i32
    %c0_i32_1 = arith.constant 0 : i32
    return %c0_i32, %c0_i32_0 : i32, i32
  }
  func.func @transform_7(%arg0: i32) -> (i32, i32) {
    %c0_i32 = arith.constant 0 : i32
    %c0_i32_0 = arith.constant 0 : i32
    %c0_i32_1 = arith.constant 0 : i32
    return %c0_i32, %c0_i32_0 : i32, i32
  }
  func.func @transform_8(%arg0: i32) -> (i32, i32) {
    %c0_i32 = arith.constant 0 : i32
    %c0_i32_0 = arith.constant 0 : i32
    %c0_i32_1 = arith.constant 0 : i32
    return %c0_i32, %c0_i32_0 : i32, i32
  }
  func.func @transform_9(%arg0: i32) -> (i32, i32) {
    %c0_i32 = arith.constant 0 : i32
    %c0_i32_0 = arith.constant 0 : i32
    return %arg0, %c0_i32 : i32, i32
  }
}

module attributes {stable_mosaic.version = 11 : i64} {
  func.func @_time_linear_kernel(%arg0: i32, %arg1: memref<8x1xf32, #tpu.memory_space<vmem>>, %arg2: memref<1x128xf32, #tpu.memory_space<vmem>>, %arg3: memref<8x16xf32, #tpu.memory_space<vmem>>, %arg4: memref<16x128xbf16, #tpu.memory_space<vmem>>, %arg5: memref<1x128xf32, #tpu.memory_space<vmem>>, %arg6: memref<256x128xbf16, #tpu.memory_space<vmem>>, %arg7: memref<1x128xf32, #tpu.memory_space<vmem>>, %arg8: memref<128x128xbf16, #tpu.memory_space<vmem>>, %arg9: memref<1x128xf32, #tpu.memory_space<vmem>>, %arg10: memref<8x128xf32, #tpu.memory_space<vmem>>) attributes {dimension_semantics = [#tpu.dimension_semantics<parallel>], iteration_bounds = array<i64: 1>, scalar_prefetch = 0 : i64, scratch_operands = 0 : i64, tpu.core_type = #tpu.core_type<tc>, window_params = [{transform_indices = @transform_0, window_bounds = array<i64: 8, 1>}, {pipeline_mode = #tpu.pipeline_mode<synchronous>, transform_indices = @transform_1, window_bounds = array<i64: 1, 128>}, {transform_indices = @transform_2, window_bounds = array<i64: 8, 16>}, {pipeline_mode = #tpu.pipeline_mode<synchronous>, transform_indices = @transform_3, window_bounds = array<i64: 16, 128>}, {pipeline_mode = #tpu.pipeline_mode<synchronous>, transform_indices = @transform_4, window_bounds = array<i64: 1, 128>}, {pipeline_mode = #tpu.pipeline_mode<synchronous>, transform_indices = @transform_5, window_bounds = array<i64: 256, 128>}, {pipeline_mode = #tpu.pipeline_mode<synchronous>, transform_indices = @transform_6, window_bounds = array<i64: 1, 128>}, {pipeline_mode = #tpu.pipeline_mode<synchronous>, transform_indices = @transform_7, window_bounds = array<i64: 128, 128>}, {pipeline_mode = #tpu.pipeline_mode<synchronous>, transform_indices = @transform_8, window_bounds = array<i64: 1, 128>}, {transform_indices = @transform_9, window_bounds = array<i64: 8, 128>}]} {
    %c0 = arith.constant 0 : index
    %c0_0 = arith.constant 0 : index
    %0 = vector.load %arg1[%c0, %c0_0] : memref<8x1xf32, #tpu.memory_space<vmem>>, vector<8x1xf32>
    %c0_1 = arith.constant 0 : index
    %c0_2 = arith.constant 0 : index
    %1 = vector.load %arg2[%c0_1, %c0_2] : memref<1x128xf32, #tpu.memory_space<vmem>>, vector<1x128xf32>
    %2 = vector.broadcast %0 : vector<8x1xf32> to vector<8x128xf32>
    %3 = vector.broadcast %1 : vector<1x128xf32> to vector<8x128xf32>
    %4 = arith.mulf %2, %3 : vector<8x128xf32>
    %5 = math.cos %4 : vector<8x128xf32>
    %6 = math.sin %4 : vector<8x128xf32>
    %7 = tpu.concatenate %5, %6 in 1 : vector<8x128xf32>, vector<8x128xf32> -> vector<8x256xf32>
    %8 = arith.truncf %7 : vector<8x256xf32> to vector<8x256xbf16>
    %c0_3 = arith.constant 0 : index
    %c0_4 = arith.constant 0 : index
    %9 = vector.load %arg6[%c0_3, %c0_4] : memref<256x128xbf16, #tpu.memory_space<vmem>>, vector<256x128xbf16>
    %cst = arith.constant dense<0.000000e+00> : vector<8x128xf32>
    %10 = tpu.matmul %8, %9, %cst {dimension_numbers = #tpu.dot_dimension_numbers<[1], [0], [0], [1], [0, 0, 1, 1], [], []>} : vector<8x256xbf16>, vector<256x128xbf16>, vector<8x128xf32> -> vector<8x128xf32>
    %c0_5 = arith.constant 0 : index
    %c0_6 = arith.constant 0 : index
    %11 = vector.load %arg7[%c0_5, %c0_6] : memref<1x128xf32, #tpu.memory_space<vmem>>, vector<1x128xf32>
    %12 = vector.broadcast %11 : vector<1x128xf32> to vector<8x128xf32>
    %13 = arith.addf %10, %12 : vector<8x128xf32>
    %14 = arith.negf %13 : vector<8x128xf32>
    %15 = math.exp %14 : vector<8x128xf32>
    %cst_7 = arith.constant 1.000000e+00 : f32
    %16 = vector.broadcast %cst_7 : f32 to vector<8x128xf32>
    %17 = arith.addf %16, %15 : vector<8x128xf32>
    %18 = arith.divf %16, %17 : vector<8x128xf32>
    %19 = arith.mulf %13, %18 : vector<8x128xf32>
    %20 = arith.truncf %19 : vector<8x128xf32> to vector<8x128xbf16>
    %c0_8 = arith.constant 0 : index
    %c0_9 = arith.constant 0 : index
    %21 = vector.load %arg8[%c0_8, %c0_9] : memref<128x128xbf16, #tpu.memory_space<vmem>>, vector<128x128xbf16>
    %cst_10 = arith.constant dense<0.000000e+00> : vector<8x128xf32>
    %22 = tpu.matmul %20, %21, %cst_10 {dimension_numbers = #tpu.dot_dimension_numbers<[1], [0], [0], [1], [0, 0, 1, 1], [], []>} : vector<8x128xbf16>, vector<128x128xbf16>, vector<8x128xf32> -> vector<8x128xf32>
    %c0_11 = arith.constant 0 : index
    %c0_12 = arith.constant 0 : index
    %23 = vector.load %arg9[%c0_11, %c0_12] : memref<1x128xf32, #tpu.memory_space<vmem>>, vector<1x128xf32>
    %24 = vector.broadcast %23 : vector<1x128xf32> to vector<8x128xf32>
    %25 = arith.addf %22, %24 : vector<8x128xf32>
    %c0_13 = arith.constant 0 : index
    %c0_14 = arith.constant 0 : index
    %26 = vector.load %arg3[%c0_13, %c0_14] : memref<8x16xf32, #tpu.memory_space<vmem>>, vector<8x16xf32>
    %27 = arith.truncf %26 : vector<8x16xf32> to vector<8x16xbf16>
    %c0_15 = arith.constant 0 : index
    %c0_16 = arith.constant 0 : index
    %28 = vector.load %arg4[%c0_15, %c0_16] : memref<16x128xbf16, #tpu.memory_space<vmem>>, vector<16x128xbf16>
    %cst_17 = arith.constant dense<0.000000e+00> : vector<8x128xf32>
    %29 = tpu.matmul %27, %28, %cst_17 {dimension_numbers = #tpu.dot_dimension_numbers<[1], [0], [0], [1], [0, 0, 1, 1], [], []>} : vector<8x16xbf16>, vector<16x128xbf16>, vector<8x128xf32> -> vector<8x128xf32>
    %c0_18 = arith.constant 0 : index
    %c0_19 = arith.constant 0 : index
    %30 = vector.load %arg5[%c0_18, %c0_19] : memref<1x128xf32, #tpu.memory_space<vmem>>, vector<1x128xf32>
    %31 = vector.broadcast %30 : vector<1x128xf32> to vector<8x128xf32>
    %32 = arith.addf %29, %31 : vector<8x128xf32>
    %33 = arith.mulf %25, %32 : vector<8x128xf32>
    %c0_20 = arith.constant 0 : index
    %c0_21 = arith.constant 0 : index
    %34 = vector.load %arg10[%c0_20, %c0_21] : memref<8x128xf32, #tpu.memory_space<vmem>>, vector<8x128xf32>
    tpu.vector_store %arg10[%c0_20, %c0_21], %33 {strides = array<i32>} : memref<8x128xf32, #tpu.memory_space<vmem>>, vector<8x128xf32>,
    return
  }
  func.func @transform_0(%arg0: i32) -> (i32, i32) {
    %c0_i32 = arith.constant 0 : i32
    %c0_i32_0 = arith.constant 0 : i32
    return %arg0, %c0_i32 : i32, i32
  }
  func.func @transform_1(%arg0: i32) -> (i32, i32) {
    %c0_i32 = arith.constant 0 : i32
    %c0_i32_0 = arith.constant 0 : i32
    %c0_i32_1 = arith.constant 0 : i32
    return %c0_i32, %c0_i32_0 : i32, i32
  }
  func.func @transform_2(%arg0: i32) -> (i32, i32) {
    %c0_i32 = arith.constant 0 : i32
    %c0_i32_0 = arith.constant 0 : i32
    return %arg0, %c0_i32 : i32, i32
  }
  func.func @transform_3(%arg0: i32) -> (i32, i32) {
    %c0_i32 = arith.constant 0 : i32
    %c0_i32_0 = arith.constant 0 : i32
    %c0_i32_1 = arith.constant 0 : i32
    return %c0_i32, %c0_i32_0 : i32, i32
  }
  func.func @transform_4(%arg0: i32) -> (i32, i32) {
    %c0_i32 = arith.constant 0 : i32
    %c0_i32_0 = arith.constant 0 : i32
    %c0_i32_1 = arith.constant 0 : i32
    return %c0_i32, %c0_i32_0 : i32, i32
  }
  func.func @transform_5(%arg0: i32) -> (i32, i32) {
    %c0_i32 = arith.constant 0 : i32
    %c0_i32_0 = arith.constant 0 : i32
    %c0_i32_1 = arith.constant 0 : i32
    return %c0_i32, %c0_i32_0 : i32, i32
  }
  func.func @transform_6(%arg0: i32) -> (i32, i32) {
    %c0_i32 = arith.constant 0 : i32
    %c0_i32_0 = arith.constant 0 : i32
    %c0_i32_1 = arith.constant 0 : i32
    return %c0_i32, %c0_i32_0 : i32, i32
  }
  func.func @transform_7(%arg0: i32) -> (i32, i32) {
    %c0_i32 = arith.constant 0 : i32
    %c0_i32_0 = arith.constant 0 : i32
    %c0_i32_1 = arith.constant 0 : i32
    return %c0_i32, %c0_i32_0 : i32, i32
  }
  func.func @transform_8(%arg0: i32) -> (i32, i32) {
    %c0_i32 = arith.constant 0 : i32
    %c0_i32_0 = arith.constant 0 : i32
    %c0_i32_1 = arith.constant 0 : i32
    return %c0_i32, %c0_i32_0 : i32, i32
  }
  func.func @transform_9(%arg0: i32) -> (i32, i32) {
    %c0_i32 = arith.constant 0 : i32
    %c0_i32_0 = arith.constant 0 : i32
    return %arg0, %c0_i32 : i32, i32
  }
}

</mosaic_0001>

<llo_original>
// kernel: tpu_custom_call.1
$region0: #{tpu_custom_call.1}
  #allocation0 [shape = 'u32[]', space=smem, size = 0x4, offset = 0x4, fixed_abs, tag = 'smem constant byte address 0x4 - core index']
  #allocation1 [shape = 'u32[72,128]{1,0:T(1,128)}', space=vmem, size = 0x9000, scoped, tag = 'internal scratch']
  %s0 = inlined_call_operand.vmem [shape: f32[8,1], index: 0, kind: input, shape index: {}]
  %s1 = inlined_call_operand.vmem [shape: f32[1,128], index: 1, kind: input, shape index: {}]
  %s2 = inlined_call_operand.vmem [shape: f32[8,16], index: 2, kind: input, shape index: {}]
  %s3 = inlined_call_operand.hbm [shape: bf16[16,128], index: 3, kind: input, shape index: {}]
  %s4 = inlined_call_operand.vmem [shape: f32[1,128], index: 4, kind: input, shape index: {}]
  %s5 = inlined_call_operand.hbm [shape: bf16[256,128], index: 5, kind: input, shape index: {}]
  %s6 = inlined_call_operand.vmem [shape: f32[1,128], index: 6, kind: input, shape index: {}]
  %s7 = inlined_call_operand.hbm [shape: bf16[128,128], index: 7, kind: input, shape index: {}]
  %s8 = inlined_call_operand.vmem [shape: f32[1,128], index: 8, kind: input, shape index: {}]
  %s9 = inlined_call_operand.hbm [shape: f32[8,128], index: 9, kind: output, shape index: {}]
  %s10 = sld [smem:[#allocation0]]
  $region58: #{tpu_custom_call.1} parent=0
    _
  %s12 = ssub.s32 1, %s10
  %s13 = scalar_select 0, %s12, %s10
  $region1: #{tpu_custom_call.1} parent=0
    #allocation2 [shape = 'u8[4096]{0}', space=vmem, size = 0x1000, scoped, tag = 'input window, operand 3, single buffered']
    #allocation3 [shape = 's32[1]{0}', space=sflag, size = 0x4, scoped, tag = 'scoped memory for tpu_custom_call.1']
    #allocation4 [shape = 's32[1]{0}', space=sflag, size = 0x4, scoped, tag = 'scoped memory for tpu_custom_call.1']
    #allocation5 [shape = 'u8[65536]{0}', space=vmem, size = 0x10000, scoped, tag = 'input window, operand 5, single buffered']
    #allocation6 [shape = 's32[1]{0}', space=sflag, size = 0x4, scoped, tag = 'scoped memory for tpu_custom_call.1']
    #allocation7 [shape = 'u8[32768]{0}', space=vmem, size = 0x8000, scoped, tag = 'input window, operand 7, single buffered']
    #allocation8 [shape = 'u8[4096]{0}', space=vmem, size = 0x1000, scoped, tag = 'output window, operand 0, single buffered']
    %14 = vsyncpa [#allocation3], 0
    %15 = vsyncpa [#allocation6], 0
    %16 = vsyncpa [#allocation4], 0
    // Predicated region
    $region2: #{tpu_custom_call.1} parent=1 // pred_check
      _
    $region3: #{tpu_custom_call.1} parent=1 // pred_check_branch
      %18 = sbr.rel (0) target = $region5
    $region4: #{tpu_custom_call.1} parent=1 // pred_region
      _
    $region5: #{tpu_custom_call.1} parent=1 // pred_fallthru
      _
    // Predicated region
    $region6: #{tpu_custom_call.1} parent=1 // pred_check
      _
    $region7: #{tpu_custom_call.1} parent=1 // pred_check_branch
      %20 = sbr.rel (0) target = $region9
    $region8: #{tpu_custom_call.1} parent=1 // pred_region
      _
    $region9: #{tpu_custom_call.1} parent=1 // pred_fallthru
      _
    // Predicated region
    $region10: #{tpu_custom_call.1} parent=1 // pred_check
      _
    $region11: #{tpu_custom_call.1} parent=1 // pred_check_branch
      %22 = sbr.rel (0) target = $region13
    $region12: #{tpu_custom_call.1} parent=1 // pred_region
      _
    $region13: #{tpu_custom_call.1} parent=1 // pred_fallthru
      _
    // Predicated region
    $region14: #{tpu_custom_call.1} parent=1 // pred_check
      _
    $region15: #{tpu_custom_call.1} parent=1 // pred_check_branch
      %24 = sbr.rel (0) target = $region17
    $region16: #{tpu_custom_call.1} parent=1 // pred_region
      %26 = vsyncadd [#allocation3], 0
      %s27 = sshll.u32 %s3, 4
      %s28 = int_to_ptr.hbm [resolvable:$true] %s27
      %s29 = sshll.u32 [#allocation2], 4
      %s30 = int_to_ptr.vmem [resolvable:$true] %s29
      %35 = dma.hbm_to_vmem [thread:$0]  %s28, 128, %s30, [#allocation3], 64, 64, 4
    $region17: #{tpu_custom_call.1} parent=1 // pred_fallthru
      _
    // Predicated region
    $region18: #{tpu_custom_call.1} parent=1 // pred_check
      _
    $region19: #{tpu_custom_call.1} parent=1 // pred_check_branch
      %37 = sbr.rel (0) target = $region21
    $region20: #{tpu_custom_call.1} parent=1 // pred_region
      _
    $region21: #{tpu_custom_call.1} parent=1 // pred_fallthru
      _
    // Predicated region
    $region22: #{tpu_custom_call.1} parent=1 // pred_check
      _
    $region23: #{tpu_custom_call.1} parent=1 // pred_check_branch
      %39 = sbr.rel (0) target = $region25
    $region24: #{tpu_custom_call.1} parent=1 // pred_region
      %41 = vsyncadd [#allocation6], 0
      %s42 = sshll.u32 %s5, 4
      %s43 = int_to_ptr.hbm [resolvable:$true] %s42
      %s44 = sshll.u32 [#allocation5], 4
      %s45 = int_to_ptr.vmem [resolvable:$true] %s44
      %50 = dma.hbm_to_vmem [thread:$0]  %s43, 2048, %s45, [#allocation6], 64, 64, 4
    $region25: #{tpu_custom_call.1} parent=1 // pred_fallthru
      _
    // Predicated region
    $region26: #{tpu_custom_call.1} parent=1 // pred_check
      _
    $region27: #{tpu_custom_call.1} parent=1 // pred_check_branch
      %52 = sbr.rel (0) target = $region29
    $region28: #{tpu_custom_call.1} parent=1 // pred_region
      _
    $region29: #{tpu_custom_call.1} parent=1 // pred_fallthru
      _
    // Predicated region
    $region30: #{tpu_custom_call.1} parent=1 // pred_check
      _
    $region31: #{tpu_custom_call.1} parent=1 // pred_check_branch
      %54 = sbr.rel (0) target = $region33
    $region32: #{tpu_custom_call.1} parent=1 // pred_region
      %56 = vsyncadd [#allocation6], 0
      %s57 = sshll.u32 %s7, 4
      %s58 = int_to_ptr.hbm [resolvable:$true] %s57
      %s59 = sshll.u32 [#allocation7], 4
      %s60 = int_to_ptr.vmem [resolvable:$true] %s59
      %65 = dma.hbm_to_vmem [thread:$0]  %s58, 1024, %s60, [#allocation6], 64, 64, 4
    $region33: #{tpu_custom_call.1} parent=1 // pred_fallthru
      _
    // Predicated region
    $region34: #{tpu_custom_call.1} parent=1 // pred_check
      _
    $region35: #{tpu_custom_call.1} parent=1 // pred_check_branch
      %67 = sbr.rel (0) target = $region37
    $region36: #{tpu_custom_call.1} parent=1 // pred_region
      _
    $region37: #{tpu_custom_call.1} parent=1 // pred_fallthru
      _
    // Predicated region
    $region38: #{tpu_custom_call.1} parent=1 // pred_check
      _
    $region39: #{tpu_custom_call.1} parent=1 // pred_check_branch
      %69 = sbr.rel (0) target = $region41
    $region40: #{tpu_custom_call.1} parent=1 // pred_region
      %71 = dma.done [#allocation3], 128
    $region41: #{tpu_custom_call.1} parent=1 // pred_fallthru
      _
    // Predicated region
    $region42: #{tpu_custom_call.1} parent=1 // pred_check
      _
    $region43: #{tpu_custom_call.1} parent=1 // pred_check_branch
      %73 = sbr.rel (0) target = $region45
    $region44: #{tpu_custom_call.1} parent=1 // pred_region
      %75 = dma.done [#allocation6], 2048
    $region45: #{tpu_custom_call.1} parent=1 // pred_fallthru
      _
    // Predicated region
    $region46: #{tpu_custom_call.1} parent=1 // pred_check
      _
    $region47: #{tpu_custom_call.1} parent=1 // pred_check_branch
      %77 = sbr.rel (0) target = $region49
    $region48: #{tpu_custom_call.1} parent=1 // pred_region
      %79 = dma.done [#allocation6], 1024
    $region49: #{tpu_custom_call.1} parent=1 // pred_fallthru
      _
    %v81 = vld [vmem:[%s0] sm:$0xff]
    %v82 = vld [vmem:[%s1] sm:$0x1]
    %84 = vset.pattern.permute.xlu0 0
    %85 = vperm.xlu0 %84, %v81
    %v86 = vpop.permute.xlu0 %85
    %v89 = vperm.slane %v82, 0
    %v91 = vmul.f32 %v86, %v89
    %v92 = vand.u32 2147483647, %v91
    %vm93 = vcmp.le.f32.partialorder %v92, 0.7853982
    %vm94 = vcmp.lt.s32.totalorder %v91, 0
    %v95 = vand.u32 %v91, 2139095040
    %v96 = vshrl.u32 %v95, 23
    %v97 = vsub.s32 %v96, 127
    %v98 = vand.u32 2147483647, %v91
    %v99 = vand.u32 %v98, 8388607
    %v100 = vor.u32 %v99, 8388608
    %v101 = vsub.s32 0, %v100
    %v102 = vadd.s32 %v97, 1
    %vm103 = vcmp.gt.s32.totalorder %v102, 0
    %v104 = vsel %vm103, %v102, 0
    %v105 = vshrl.u32 %v104, 5
    %v106 = vand.u32 %v104, 31
    %v107 = vsub.s32 32, %v106
    %v108 = vshrl.u32 683565275, %v107
    %v109 = vshll.u32 683565275, %v106
    %v110 = vshrl.u32 2475754826, %v107
    %v111 = vor.u32 %v109, %v110
    %v112 = vshll.u32 2475754826, %v106
    %v113 = vshrl.u32 2131351028, %v107
    %v114 = vor.u32 %v112, %v113
    %v115 = vshll.u32 2131351028, %v106
    %v116 = vshrl.u32 2102212464, %v107
    %v117 = vor.u32 %v115, %v116
    %v118 = vshll.u32 2102212464, %v106
    %v119 = vshrl.u32 920167782, %v107
    %v120 = vor.u32 %v118, %v119
    %v121 = vshll.u32 920167782, %v106
    %v122 = vshrl.u32 1326507024, %v107
    %v123 = vor.u32 %v121, %v122
    %vm124 = vcmp.lt.s32.totalorder %v105, 1
    %vm125 = vcmp.lt.s32.totalorder %v105, 2
    %vm126 = vcmp.lt.s32.totalorder %v105, 3
    %vm127 = vcmp.lt.s32.totalorder %v105, 4
    %v128 = vsel %vm124, %v108, %v111
    %v129 = vsel %vm127, %v117, 2102212464
    %v130 = vsel %vm126, %v114, %v129
    %v131 = vsel %vm125, %v128, %v130
    %v132 = vsel %vm124, %v111, %v114
    %v133 = vsel %vm127, %v120, 920167782
    %v134 = vsel %vm126, %v117, %v133
    %v135 = vsel %vm125, %v132, %v134
    %v136 = vsel %vm124, %v114, %v117
    %v137 = vsel %vm127, %v123, 1326507024
    %v138 = vsel %vm126, %v120, %v137
    %v139 = vsel %vm125, %v136, %v138
    %v140 = vshll.u32 %v100, 8
    %v141 = vand.u32 %v140, 65535
    %v142 = vshrl.u32 %v140, 16
    %v143 = vand.u32 %v139, 65535
    %v144 = vshrl.u32 %v139, 16
    %v145 = vmul.u32 %v141, %v143
    %v146 = vmul.u32 %v141, %v144
    %v147 = vmul.u32 %v142, %v143
    %v148 = vmul.u32 %v142, %v144
    %v149 = vshll.u32 %v146, 16
    %v150 = vshrl.u32 %v146, 16
    %v151 = vshll.u32 %v147, 16
    %v152 = vshrl.u32 %v147, 16
    %vm153 = vc.u32 %v145, %v149
    %v154 = vsel %vm153, 1, 0
    %v155 = vadd.s32 %v145, %v149
    %v156 = vadd.s32 %v148, %v154
    %vm157 = vc.u32 %v155, %v151
    %v158 = vsel %vm157, 1, 0
    %v159 = vadd.s32 %v155, %v151
    %v160 = vadd.s32 %v156, %v158
    %v161 = vadd.s32 %v160, %v150
    %v162 = vadd.s32 %v161, %v152
    %v163 = vand.u32 %v140, 65535
    %v164 = vshrl.u32 %v140, 16
    %v165 = vand.u32 %v135, 65535
    %v166 = vshrl.u32 %v135, 16
    %v167 = vmul.u32 %v163, %v165
    %v168 = vmul.u32 %v163, %v166
    %v169 = vmul.u32 %v164, %v165
    %v170 = vmul.u32 %v164, %v166
    %v171 = vshll.u32 %v168, 16
    %v172 = vshrl.u32 %v168, 16
    %v173 = vshll.u32 %v169, 16
    %v174 = vshrl.u32 %v169, 16
    %vm175 = vc.u32 %v167, %v171
    %v176 = vsel %vm175, 1, 0
    %v177 = vadd.s32 %v167, %v171
    %v178 = vadd.s32 %v170, %v176
    %vm179 = vc.u32 %v177, %v173
    %v180 = vsel %vm179, 1, 0
    %v181 = vadd.s32 %v177, %v173
    %v182 = vadd.s32 %v178, %v180
    %v183 = vadd.s32 %v182, %v172
    %v184 = vadd.s32 %v183, %v174
    %v185 = vmul.u32 %v140, %v131
    %v186 = vadd.s32 %v162, %v181
    %vm187 = vc.u32 %v162, %v181
    %v188 = vadd.s32 %v184, 1
    %v189 = vsel %vm187, %v188, %v184
    %v190 = vadd.s32 %v185, %v189
    %v191 = vadd.s32 %v190, 536870912
    %v192 = vshrl.u32 %v191, 30
    %v193 = vshll.u32 %v192, 30
    %v194 = vsub.s32 %v190, %v193
    %vm195 = vcmp.lt.s32.totalorder %v194, 0
    %v196 = vsub.s32 0, %v194
    %v197 = vsel %vm195, %v196, %v194
    %v198 = vclz %v197
    %v199 = vsub.s32 %v198, 2
    %vm200 = vcmp.gt.s32.totalorder 0, %v199
    %v201 = vsel %vm200, 0, %v199
    %v202 = vsub.s32 32, %v201
    %v203 = vshll.u32 %v194, %v201
    %v204 = vshrl.u32 %v186, %v202
    %v205 = vor.u32 %v203, %v204
    %v206 = vsub.s32 4294967266, %v201
    %v207 = vadd.s32 %v206, 127
    %v208 = vshll.u32 %v207, 23
    %v209 = vor.u32 4788187, %v208
    %v210 = vand.u32 2147483647, %v209
    %v212 = vcvt.s32.f32 %v205
    %v213 = vmul.f32 %v212, %v210
    %v214 = vxor.u32 %v213, 2147483648
    %v215 = vsel %vm94, %v214, %v213
    %v216 = vsub.s32 4, %v192
    %v217 = vsel %vm94, %v216, %v192
    %v218 = vsel %vm93, %v91, %v215
    %v219 = vsel %vm93, 0, %v217
    %v220 = vmul.f32 %v218, %v218
    %v221 = vmul.f32 %v220, -0.001358992
    %v222 = vadd.f32 %v221, 0.041655596
    %v223 = vmul.f32 %v220, %v222
    %v224 = vadd.f32 %v223, -0.4999988
    %v225 = vmul.f32 %v220, %v224
    %v226 = vadd.f32 1.0, %v225
    %v227 = vmul.f32 %v218, %v218
    %v228 = vmul.f32 %v227, -0.00019511016
    %v229 = vadd.f32 %v228, 0.008332121
    %v230 = vmul.f32 %v227, %v229
    %v231 = vadd.f32 %v230, -0.16666654
    %v232 = vmul.f32 %v227, %v231
    %v233 = vadd.f32 %v232, 1.0
    %v234 = vmul.f32 %v233, %v218
    %vm235 = vweird.f32 %v91
    %v236 = vand.u32 %v219, 3
    %vm237 = vcmp.lt.s32.totalorder %v236, 2
    %vm238 = vcmp.eq.s32.totalorder %v236, 0
    %v239 = vxor.u32 %v234, 2147483648
    %v240 = vsel %vm238, %v226, %v239
    %vm241 = vcmp.eq.s32.totalorder %v236, 2
    %v242 = vxor.u32 %v226, 2147483648
    %v243 = vsel %vm241, %v242, %v234
    %v244 = vsel %vm237, %v240, %v243
    %v245 = vsel %vm235, nan, %v244
    %v246 = vand.u32 2147483647, %v91
    %vm247 = vcmp.le.f32.partialorder %v246, 0.7853982
    %vm248 = vcmp.lt.s32.totalorder %v91, 0
    %v249 = vand.u32 %v91, 2139095040
    %v250 = vshrl.u32 %v249, 23
    %v251 = vsub.s32 %v250, 127
    %v252 = vand.u32 2147483647, %v91
    %v253 = vand.u32 %v252, 8388607
    %v254 = vor.u32 %v253, 8388608
    %v255 = vsub.s32 0, %v254
    %v256 = vadd.s32 %v251, 1
    %vm257 = vcmp.gt.s32.totalorder %v256, 0
    %v258 = vsel %vm257, %v256, 0
    %v259 = vshrl.u32 %v258, 5
    %v260 = vand.u32 %v258, 31
    %v261 = vsub.s32 32, %v260
    %v262 = vshrl.u32 683565275, %v261
    %v263 = vshll.u32 683565275, %v260
    %v264 = vshrl.u32 2475754826, %v261
    %v265 = vor.u32 %v263, %v264
    %v266 = vshll.u32 2475754826, %v260
    %v267 = vshrl.u32 2131351028, %v261
    %v268 = vor.u32 %v266, %v267
    %v269 = vshll.u32 2131351028, %v260
    %v270 = vshrl.u32 2102212464, %v261
    %v271 = vor.u32 %v269, %v270
    %v272 = vshll.u32 2102212464, %v260
    %v273 = vshrl.u32 920167782, %v261
    %v274 = vor.u32 %v272, %v273
    %v275 = vshll.u32 920167782, %v260
    %v276 = vshrl.u32 1326507024, %v261
    %v277 = vor.u32 %v275, %v276
    %vm278 = vcmp.lt.s32.totalorder %v259, 1
    %vm279 = vcmp.lt.s32.totalorder %v259, 2
    %vm280 = vcmp.lt.s32.totalorder %v259, 3
    %vm281 = vcmp.lt.s32.totalorder %v259, 4
    %v282 = vsel %vm278, %v262, %v265
    %v283 = vsel %vm281, %v271, 2102212464
    %v284 = vsel %vm280, %v268, %v283
    %v285 = vsel %vm279, %v282, %v284
    %v286 = vsel %vm278, %v265, %v268
    %v287 = vsel %vm281, %v274, 920167782
    %v288 = vsel %vm280, %v271, %v287
    %v289 = vsel %vm279, %v286, %v288
    %v290 = vsel %vm278, %v268, %v271
    %v291 = vsel %vm281, %v277, 1326507024
    %v292 = vsel %vm280, %v274, %v291
    %v293 = vsel %vm279, %v290, %v292
    %v294 = vshll.u32 %v254, 8
    %v295 = vand.u32 %v294, 65535
    %v296 = vshrl.u32 %v294, 16
    %v297 = vand.u32 %v293, 65535
    %v298 = vshrl.u32 %v293, 16
    %v299 = vmul.u32 %v295, %v297
    %v300 = vmul.u32 %v295, %v298
    %v301 = vmul.u32 %v296, %v297
    %v302 = vmul.u32 %v296, %v298
    %v303 = vshll.u32 %v300, 16
    %v304 = vshrl.u32 %v300, 16
    %v305 = vshll.u32 %v301, 16
    %v306 = vshrl.u32 %v301, 16
    %vm307 = vc.u32 %v299, %v303
    %v308 = vsel %vm307, 1, 0
    %v309 = vadd.s32 %v299, %v303
    %v310 = vadd.s32 %v302, %v308
    %vm311 = vc.u32 %v309, %v305
    %v312 = vsel %vm311, 1, 0
    %v313 = vadd.s32 %v309, %v305
    %v314 = vadd.s32 %v310, %v312
    %v315 = vadd.s32 %v314, %v304
    %v316 = vadd.s32 %v315, %v306
    %v317 = vand.u32 %v294, 65535
    %v318 = vshrl.u32 %v294, 16
    %v319 = vand.u32 %v289, 65535
    %v320 = vshrl.u32 %v289, 16
    %v321 = vmul.u32 %v317, %v319
    %v322 = vmul.u32 %v317, %v320
    %v323 = vmul.u32 %v318, %v319
    %v324 = vmul.u32 %v318, %v320
    %v325 = vshll.u32 %v322, 16
    %v326 = vshrl.u32 %v322, 16
    %v327 = vshll.u32 %v323, 16
    %v328 = vshrl.u32 %v323, 16
    %vm329 = vc.u32 %v321, %v325
    %v330 = vsel %vm329, 1, 0
    %v331 = vadd.s32 %v321, %v325
    %v332 = vadd.s32 %v324, %v330
    %vm333 = vc.u32 %v331, %v327
    %v334 = vsel %vm333, 1, 0
    %v335 = vadd.s32 %v331, %v327
    %v336 = vadd.s32 %v332, %v334
    %v337 = vadd.s32 %v336, %v326
    %v338 = vadd.s32 %v337, %v328
    %v339 = vmul.u32 %v294, %v285
    %v340 = vadd.s32 %v316, %v335
    %vm341 = vc.u32 %v316, %v335
    %v342 = vadd.s32 %v338, 1
    %v343 = vsel %vm341, %v342, %v338
    %v344 = vadd.s32 %v339, %v343
    %v345 = vadd.s32 %v344, 536870912
    %v346 = vshrl.u32 %v345, 30
    %v347 = vshll.u32 %v346, 30
    %v348 = vsub.s32 %v344, %v347
    %vm349 = vcmp.lt.s32.totalorder %v348, 0
    %v350 = vsub.s32 0, %v348
    %v351 = vsel %vm349, %v350, %v348
    %v352 = vclz %v351
    %v353 = vsub.s32 %v352, 2
    %vm354 = vcmp.gt.s32.totalorder 0, %v353
    %v355 = vsel %vm354, 0, %v353
    %v356 = vsub.s32 32, %v355
    %v357 = vshll.u32 %v348, %v355
    %v358 = vshrl.u32 %v340, %v356
    %v359 = vor.u32 %v357, %v358
    %v360 = vsub.s32 4294967266, %v355
    %v361 = vadd.s32 %v360, 127
    %v362 = vshll.u32 %v361, 23
    %v363 = vor.u32 4788187, %v362
    %v364 = vand.u32 2147483647, %v363
    %v366 = vcvt.s32.f32 %v359
    %v367 = vmul.f32 %v366, %v364
    %v368 = vxor.u32 %v367, 2147483648
    %v369 = vsel %vm248, %v368, %v367
    %v370 = vsub.s32 4, %v346
    %v371 = vsel %vm248, %v370, %v346
    %v372 = vsel %vm247, %v91, %v369
    %v373 = vsel %vm247, 0, %v371
    %v374 = vmul.f32 %v372, %v372
    %v375 = vmul.f32 %v374, -0.001358992
    %v376 = vadd.f32 %v375, 0.041655596
    %v377 = vmul.f32 %v374, %v376
    %v378 = vadd.f32 %v377, -0.4999988
    %v379 = vmul.f32 %v374, %v378
    %v380 = vadd.f32 1.0, %v379
    %v381 = vmul.f32 %v372, %v372
    %v382 = vmul.f32 %v381, -0.00019511016
    %v383 = vadd.f32 %v382, 0.008332121
    %v384 = vmul.f32 %v381, %v383
    %v385 = vadd.f32 %v384, -0.16666654
    %v386 = vmul.f32 %v381, %v385
    %v387 = vadd.f32 %v386, 1.0
    %v388 = vmul.f32 %v387, %v372
    %vm389 = vweird.f32 %v91
    %v390 = vadd.s32 %v373, 3
    %v391 = vand.u32 %v390, 3
    %vm392 = vcmp.lt.s32.totalorder %v391, 2
    %vm393 = vcmp.eq.s32.totalorder %v391, 0
    %v394 = vxor.u32 %v388, 2147483648
    %v395 = vsel %vm393, %v380, %v394
    %vm396 = vcmp.eq.s32.totalorder %v391, 2
    %v397 = vxor.u32 %v380, 2147483648
    %v398 = vsel %vm396, %v397, %v388
    %v399 = vsel %vm392, %v395, %v398
    %v400 = vsel %vm389, nan, %v399
    %v401 = vpack.c.bf16 %v245, %v245
    %v402 = vpack.c.bf16 %v400, %v400
    %v403 = vld [vmem:[#allocation5] sm:$0xf]
    %v404 = vld [vmem:[#allocation5 + $0x4] sm:$0xf]
    %v405 = vld [vmem:[#allocation5 + $0x8] sm:$0xf]
    %v406 = vld [vmem:[#allocation5 + $0xc] sm:$0xf]
    %v407 = vld [vmem:[#allocation5 + $0x10] sm:$0xf]
    %v408 = vld [vmem:[#allocation5 + $0x14] sm:$0xf]
    %v409 = vld [vmem:[#allocation5 + $0x18] sm:$0xf]
    %v410 = vld [vmem:[#allocation5 + $0x1c] sm:$0xf]
    %v411 = vld [vmem:[#allocation5 + $0x20] sm:$0xf]
    %v412 = vld [vmem:[#allocation5 + $0x24] sm:$0xf]
    %v413 = vld [vmem:[#allocation5 + $0x28] sm:$0xf]
    %v414 = vld [vmem:[#allocation5 + $0x2c] sm:$0xf]
    %v415 = vld [vmem:[#allocation5 + $0x30] sm:$0xf]
    %v416 = vld [vmem:[#allocation5 + $0x34] sm:$0xf]
    %v417 = vld [vmem:[#allocation5 + $0x38] sm:$0xf]
    %v418 = vld [vmem:[#allocation5 + $0x3c] sm:$0xf]
    %v419 = vld [vmem:[#allocation5 + $0x40] sm:$0xf]
    %v420 = vld [vmem:[#allocation5 + $0x44] sm:$0xf]
    %v421 = vld [vmem:[#allocation5 + $0x48] sm:$0xf]
    %v422 = vld [vmem:[#allocation5 + $0x4c] sm:$0xf]
    %v423 = vld [vmem:[#allocation5 + $0x50] sm:$0xf]
    %v424 = vld [vmem:[#allocation5 + $0x54] sm:$0xf]
    %v425 = vld [vmem:[#allocation5 + $0x58] sm:$0xf]
    %v426 = vld [vmem:[#allocation5 + $0x5c] sm:$0xf]
    %v427 = vld [vmem:[#allocation5 + $0x60] sm:$0xf]
    %v428 = vld [vmem:[#allocation5 + $0x64] sm:$0xf]
    %v429 = vld [vmem:[#allocation5 + $0x68] sm:$0xf]
    %v430 = vld [vmem:[#allocation5 + $0x6c] sm:$0xf]
    %v431 = vld [vmem:[#allocation5 + $0x70] sm:$0xf]
    %v432 = vld [vmem:[#allocation5 + $0x74] sm:$0xf]
    %v433 = vld [vmem:[#allocation5 + $0x78] sm:$0xf]
    %v434 = vld [vmem:[#allocation5 + $0x7c] sm:$0xf]
    %v435 = vld [vmem:[%s6] sm:$0x1]
    %v437 = vperm.slane %v435, 0
    %v471 = vunpack.c.l.b16 %v403
    %v472 = vunpack.c.l.b16 %v404
    %v473 = vunpack.c.l.b16 %v405
    %v474 = vunpack.c.l.b16 %v406
    %v475 = vunpack.c.l.b16 %v407
    %v476 = vunpack.c.l.b16 %v408
    %v477 = vunpack.c.l.b16 %v409
    %v478 = vunpack.c.l.b16 %v410
    %v479 = vunpack.c.l.b16 %v411
    %v480 = vunpack.c.l.b16 %v412
    %v481 = vunpack.c.l.b16 %v413
    %v482 = vunpack.c.l.b16 %v414
    %v483 = vunpack.c.l.b16 %v415
    %v484 = vunpack.c.l.b16 %v416
    %v485 = vunpack.c.l.b16 %v417
    %v486 = vunpack.c.l.b16 %v418
    %v487 = vunpack.c.l.b16 %v419
    %v488 = vunpack.c.l.b16 %v420
    %v489 = vunpack.c.l.b16 %v421
    %v490 = vunpack.c.l.b16 %v422
    %v491 = vunpack.c.l.b16 %v423
    %v492 = vunpack.c.l.b16 %v424
    %v493 = vunpack.c.l.b16 %v425
    %v494 = vunpack.c.l.b16 %v426
    %v495 = vunpack.c.l.b16 %v427
    %v496 = vunpack.c.l.b16 %v428
    %v497 = vunpack.c.l.b16 %v429
    %v498 = vunpack.c.l.b16 %v430
    %v499 = vunpack.c.l.b16 %v431
    %v500 = vunpack.c.l.b16 %v432
    %v501 = vunpack.c.l.b16 %v433
    %v502 = vunpack.c.l.b16 %v434
    %v503 = vpack.c.b16 %v472, %v471
    %v504 = vpack.c.b16 %v474, %v473
    %v505 = vpack.c.b16 %v476, %v475
    %v506 = vpack.c.b16 %v478, %v477
    %v507 = vpack.c.b16 %v480, %v479
    %v508 = vpack.c.b16 %v482, %v481
    %v509 = vpack.c.b16 %v484, %v483
    %v510 = vpack.c.b16 %v486, %v485
    %v511 = vpack.c.b16 %v488, %v487
    %v512 = vpack.c.b16 %v490, %v489
    %v513 = vpack.c.b16 %v492, %v491
    %v514 = vpack.c.b16 %v494, %v493
    %v515 = vpack.c.b16 %v496, %v495
    %v516 = vpack.c.b16 %v498, %v497
    %v517 = vpack.c.b16 %v500, %v499
    %v518 = vpack.c.b16 %v502, %v501
    %535 = vmatpush.bf16.msra.mxu0 %v510
    %536 = vmatpush.bf16.msra.mxu0 %v509
    %537 = vmatpush.bf16.msra.mxu0 %v508
    %538 = vmatpush.bf16.msra.mxu0 %v507
    %539 = vmatpush.bf16.msra.mxu0 %v506
    %540 = vmatpush.bf16.msra.mxu0 %v505
    %541 = vmatpush.bf16.msra.mxu0 %v504
    %542 = vmatpush.bf16.msra.mxu0 %v503
    %543 = vmatmul.bf16.gmra.mxu0 %v401
    %v544 = vpop.f32.mrf.mxu0
    %v545 = vadd.f32 %v437, %v544
    %v546 = vpop.f32.mrf.mxu0
    %547 = vdwg.mxu0
    %548 = vmatpush.bf16.msra.mxu0 %v518
    %549 = vmatpush.bf16.msra.mxu0 %v517
    %550 = vmatpush.bf16.msra.mxu0 %v516
    %551 = vmatpush.bf16.msra.mxu0 %v515
    %552 = vmatpush.bf16.msra.mxu0 %v514
    %553 = vmatpush.bf16.msra.mxu0 %v513
    %554 = vmatpush.bf16.msra.mxu0 %v512
    %555 = vmatpush.bf16.msra.mxu0 %v511
    %556 = vmatmul.bf16.gmra.mxu0 %v402
    %v557 = vpop.f32.mrf.mxu0
    %v558 = vadd.f32 %v545, %v557
    %v559 = vpop.f32.mrf.mxu0
    %560 = vdwg.mxu0
    %v561 = vxor.u32 %v558, 2147483648
    %v562 = vmul.f32 %v561, 1.442695
    %v563 = vpow.pop %v562
    %v564 = vadd.f32 %v563, 1.0
    %v565 = vrcp.pop %v564
    %v566 = vmul.f32 %v564, %v565
    %v567 = vsub.f32 1.0, %v566
    %v568 = vmul.f32 %v565, %v567
    %v569 = vadd.f32 %v565, %v568
    %vm570 = vweird.f32 %v564
    %vm571 = vweird.f32 %v565
    %vm572 = vmor %vm570, %vm571
    %v573 = vsel %vm572, %v565, %v569
    %v574 = vand.u32 2147483647, %v564
    %vm575 = vcmp.eq.f32.partialorder %v574, 8.507059e+37
    %v576 = vand.u32 %v564, 2147483648
    %v577 = vor.u32 1.1754944e-38, %v576
    %v578 = vsel %vm575, %v577, %v573
    %v579 = vmul.f32 1.0, %v578
    %v580 = vmul.f32 %v558, %v579
    %v581 = vpack.c.bf16 %v580, %v580
    %v582 = vld [vmem:[#allocation7] sm:$0xf]
    %v583 = vld [vmem:[#allocation7 + $0x4] sm:$0xf]
    %v584 = vld [vmem:[#allocation7 + $0x8] sm:$0xf]
    %v585 = vld [vmem:[#allocation7 + $0xc] sm:$0xf]
    %v586 = vld [vmem:[#allocation7 + $0x10] sm:$0xf]
    %v587 = vld [vmem:[#allocation7 + $0x14] sm:$0xf]
    %v588 = vld [vmem:[#allocation7 + $0x18] sm:$0xf]
    %v589 = vld [vmem:[#allocation7 + $0x1c] sm:$0xf]
    %v590 = vld [vmem:[#allocation7 + $0x20] sm:$0xf]
    %v591 = vld [vmem:[#allocation7 + $0x24] sm:$0xf]
    %v592 = vld [vmem:[#allocation7 + $0x28] sm:$0xf]
    %v593 = vld [vmem:[#allocation7 + $0x2c] sm:$0xf]
    %v594 = vld [vmem:[#allocation7 + $0x30] sm:$0xf]
    %v595 = vld [vmem:[#allocation7 + $0x34] sm:$0xf]
    %v596 = vld [vmem:[#allocation7 + $0x38] sm:$0xf]
    %v597 = vld [vmem:[#allocation7 + $0x3c] sm:$0xf]
    %v598 = vld [vmem:[%s8] sm:$0x1]
    %v600 = vperm.slane %v598, 0
    %v618 = vunpack.c.l.b16 %v582
    %v619 = vunpack.c.l.b16 %v583
    %v620 = vunpack.c.l.b16 %v584
    %v621 = vunpack.c.l.b16 %v585
    %v622 = vunpack.c.l.b16 %v586
    %v623 = vunpack.c.l.b16 %v587
    %v624 = vunpack.c.l.b16 %v588
    %v625 = vunpack.c.l.b16 %v589
    %v626 = vunpack.c.l.b16 %v590
    %v627 = vunpack.c.l.b16 %v591
    %v628 = vunpack.c.l.b16 %v592
    %v629 = vunpack.c.l.b16 %v593
    %v630 = vunpack.c.l.b16 %v594
    %v631 = vunpack.c.l.b16 %v595
    %v632 = vunpack.c.l.b16 %v596
    %v633 = vunpack.c.l.b16 %v597
    %v634 = vpack.c.b16 %v619, %v618
    %v635 = vpack.c.b16 %v621, %v620
    %v636 = vpack.c.b16 %v623, %v622
    %v637 = vpack.c.b16 %v625, %v624
    %v638 = vpack.c.b16 %v627, %v626
    %v639 = vpack.c.b16 %v629, %v628
    %v640 = vpack.c.b16 %v631, %v630
    %v641 = vpack.c.b16 %v633, %v632
    %650 = vmatpush.bf16.msra.mxu0 %v641
    %651 = vmatpush.bf16.msra.mxu0 %v640
    %652 = vmatpush.bf16.msra.mxu0 %v639
    %653 = vmatpush.bf16.msra.mxu0 %v638
    %654 = vmatpush.bf16.msra.mxu0 %v637
    %655 = vmatpush.bf16.msra.mxu0 %v636
    %656 = vmatpush.bf16.msra.mxu0 %v635
    %657 = vmatpush.bf16.msra.mxu0 %v634
    %658 = vmatmul.bf16.gmra.mxu0 %v581
    %v659 = vpop.f32.mrf.mxu0
    %v660 = vadd.f32 %v600, %v659
    %v661 = vpop.f32.mrf.mxu0
    %662 = vdwg.mxu0
    %v663 = vld [vmem:[%s2] sm:$0xff]
    %v664 = vpack.c.bf16 %v663, %v663
    %v665 = vld [vmem:[#allocation2] sm:$0xf]
    %v666 = vld [vmem:[#allocation2 + $0x4] sm:$0xf]
    %v667 = vld [vmem:[%s4] sm:$0x1]
    %v669 = vperm.slane %v667, 0
    %v673 = vunpack.c.l.b16 %v665
    %v674 = vunpack.c.l.b16 %v666
    %v675 = vpack.c.b16 %v674, %v673
    %vm677 = vcmask 130048
    %v679 = vsel %vm677, %v664, 0
    %681 = vmatpush.bf16.msra.mxu0 0
    %682 = vmatpush.bf16.msra.mxu0 0
    %683 = vmatpush.bf16.msra.mxu0 0
    %684 = vmatpush.bf16.msra.mxu0 0
    %685 = vmatpush.bf16.msra.mxu0 0
    %686 = vmatpush.bf16.msra.mxu0 0
    %687 = vmatpush.bf16.msra.mxu0 0
    %688 = vmatpush.bf16.msra.mxu0 %v675
    %689 = vmatmul.bf16.gmra.mxu0 %v679
    %v690 = vpop.f32.mrf.mxu0
    %v691 = vadd.f32 %v669, %v690
    %v692 = vpop.f32.mrf.mxu0
    %693 = vdwg.mxu0
    %v694 = vmul.f32 %v660, %v691
    %695 = vst [vmem:[#allocation8] sm:$0xff] %v694
    // Predicated region
    $region50: #{tpu_custom_call.1} parent=1 // pred_check
      _
    $region51: #{tpu_custom_call.1} parent=1 // pred_check_branch
      %697 = sbr.rel (0) target = $region53
    $region52: #{tpu_custom_call.1} parent=1 // pred_region
      %699 = vsyncadd [#allocation4], 0
      %s701 = sshll.u32 [#allocation8], 4
      %s702 = int_to_ptr.vmem [resolvable:$true] %s701
      %s703 = sshll.u32 %s9, 4
      %s704 = int_to_ptr.hbm [resolvable:$true] %s703
      %706 = dma.vmem_to_hbm [thread:$0]  %s702, 128, %s704, [#allocation4]
    $region53: #{tpu_custom_call.1} parent=1 // pred_fallthru
      _
    // Predicated region
    $region54: #{tpu_custom_call.1} parent=1 // pred_check
      _
    $region55: #{tpu_custom_call.1} parent=1 // pred_check_branch
      %708 = sbr.rel (0) target = $region57
    $region56: #{tpu_custom_call.1} parent=1 // pred_region
      %710 = dma.done [#allocation4], 128
    $region57: #{tpu_custom_call.1} parent=1 // pred_fallthru
      _
    %711 = vsyncpa [#allocation3], 1
    %712 = vsyncpa [#allocation6], 1
    %713 = vsyncpa [#allocation4], 1

// kernel: tpu_custom_call.1
$region0: #{tpu_custom_call.1}
  #allocation0 [shape = 'u32[]', space=smem, size = 0x4, offset = 0x4, fixed_abs, tag = 'smem constant byte address 0x4 - core index']
  #allocation1 [shape = 'u32[72,128]{1,0:T(1,128)}', space=vmem, size = 0x9000, scoped, tag = 'internal scratch']
  %s0 = inlined_call_operand.vmem [shape: f32[8,1], index: 0, kind: input, shape index: {}]
  %s1 = inlined_call_operand.vmem [shape: f32[1,128], index: 1, kind: input, shape index: {}]
  %s2 = inlined_call_operand.vmem [shape: f32[8,16], index: 2, kind: input, shape index: {}]
  %s3 = inlined_call_operand.hbm [shape: bf16[16,128], index: 3, kind: input, shape index: {}]
  %s4 = inlined_call_operand.vmem [shape: f32[1,128], index: 4, kind: input, shape index: {}]
  %s5 = inlined_call_operand.hbm [shape: bf16[256,128], index: 5, kind: input, shape index: {}]
  %s6 = inlined_call_operand.vmem [shape: f32[1,128], index: 6, kind: input, shape index: {}]
  %s7 = inlined_call_operand.hbm [shape: bf16[128,128], index: 7, kind: input, shape index: {}]
  %s8 = inlined_call_operand.vmem [shape: f32[1,128], index: 8, kind: input, shape index: {}]
  %s9 = inlined_call_operand.hbm [shape: f32[8,128], index: 9, kind: output, shape index: {}]
  %s10 = sld [smem:[#allocation0]]
  $region58: #{tpu_custom_call.1} parent=0
    _
  %s12 = ssub.s32 1, %s10
  %s13 = scalar_select 0, %s12, %s10
  $region1: #{tpu_custom_call.1} parent=0
    #allocation2 [shape = 'u8[4096]{0}', space=vmem, size = 0x1000, scoped, tag = 'input window, operand 3, single buffered']
    #allocation3 [shape = 's32[1]{0}', space=sflag, size = 0x4, scoped, tag = 'scoped memory for tpu_custom_call.1']
    #allocation4 [shape = 's32[1]{0}', space=sflag, size = 0x4, scoped, tag = 'scoped memory for tpu_custom_call.1']
    #allocation5 [shape = 'u8[65536]{0}', space=vmem, size = 0x10000, scoped, tag = 'input window, operand 5, single buffered']
    #allocation6 [shape = 's32[1]{0}', space=sflag, size = 0x4, scoped, tag = 'scoped memory for tpu_custom_call.1']
    #allocation7 [shape = 'u8[32768]{0}', space=vmem, size = 0x8000, scoped, tag = 'input window, operand 7, single buffered']
    #allocation8 [shape = 'u8[4096]{0}', space=vmem, size = 0x1000, scoped, tag = 'output window, operand 0, single buffered']
    %14 = vsyncpa [#allocation3], 0
    %15 = vsyncpa [#allocation6], 0
    %16 = vsyncpa [#allocation4], 0
    // Predicated region
    $region2: #{tpu_custom_call.1} parent=1 // pred_check
      _
    $region3: #{tpu_custom_call.1} parent=1 // pred_check_branch
      %18 = sbr.rel (0) target = $region5
    $region4: #{tpu_custom_call.1} parent=1 // pred_region
      _
    $region5: #{tpu_custom_call.1} parent=1 // pred_fallthru
      _
    // Predicated region
    $region6: #{tpu_custom_call.1} parent=1 // pred_check
      _
    $region7: #{tpu_custom_call.1} parent=1 // pred_check_branch
      %20 = sbr.rel (0) target = $region9
    $region8: #{tpu_custom_call.1} parent=1 // pred_region
      _
    $region9: #{tpu_custom_call.1} parent=1 // pred_fallthru
      _
    // Predicated region
    $region10: #{tpu_custom_call.1} parent=1 // pred_check
      _
    $region11: #{tpu_custom_call.1} parent=1 // pred_check_branch
      %22 = sbr.rel (0) target = $region13
    $region12: #{tpu_custom_call.1} parent=1 // pred_region
      _
    $region13: #{tpu_custom_call.1} parent=1 // pred_fallthru
      _
    // Predicated region
    $region14: #{tpu_custom_call.1} parent=1 // pred_check
      _
    $region15: #{tpu_custom_call.1} parent=1 // pred_check_branch
      %24 = sbr.rel (0) target = $region17
    $region16: #{tpu_custom_call.1} parent=1 // pred_region
      %26 = vsyncadd [#allocation3], 0
      %s27 = sshll.u32 %s3, 4
      %s28 = int_to_ptr.hbm [resolvable:$true] %s27
      %s29 = sshll.u32 [#allocation2], 4
      %s30 = int_to_ptr.vmem [resolvable:$true] %s29
      %35 = dma.hbm_to_vmem [thread:$0]  %s28, 128, %s30, [#allocation3], 64, 64, 4
    $region17: #{tpu_custom_call.1} parent=1 // pred_fallthru
      _
    // Predicated region
    $region18: #{tpu_custom_call.1} parent=1 // pred_check
      _
    $region19: #{tpu_custom_call.1} parent=1 // pred_check_branch
      %37 = sbr.rel (0) target = $region21
    $region20: #{tpu_custom_call.1} parent=1 // pred_region
      _
    $region21: #{tpu_custom_call.1} parent=1 // pred_fallthru
      _
    // Predicated region
    $region22: #{tpu_custom_call.1} parent=1 // pred_check
      _
    $region23: #{tpu_custom_call.1} parent=1 // pred_check_branch
      %39 = sbr.rel (0) target = $region25
    $region24: #{tpu_custom_call.1} parent=1 // pred_region
      %41 = vsyncadd [#allocation6], 0
      %s42 = sshll.u32 %s5, 4
      %s43 = int_to_ptr.hbm [resolvable:$true] %s42
      %s44 = sshll.u32 [#allocation5], 4
      %s45 = int_to_ptr.vmem [resolvable:$true] %s44
      %50 = dma.hbm_to_vmem [thread:$0]  %s43, 2048, %s45, [#allocation6], 64, 64, 4
    $region25: #{tpu_custom_call.1} parent=1 // pred_fallthru
      _
    // Predicated region
    $region26: #{tpu_custom_call.1} parent=1 // pred_check
      _
    $region27: #{tpu_custom_call.1} parent=1 // pred_check_branch
      %52 = sbr.rel (0) target = $region29
    $region28: #{tpu_custom_call.1} parent=1 // pred_region
      _
    $region29: #{tpu_custom_call.1} parent=1 // pred_fallthru
      _
    // Predicated region
    $region30: #{tpu_custom_call.1} parent=1 // pred_check
      _
    $region31: #{tpu_custom_call.1} parent=1 // pred_check_branch
      %54 = sbr.rel (0) target = $region33
    $region32: #{tpu_custom_call.1} parent=1 // pred_region
      %56 = vsyncadd [#allocation6], 0
      %s57 = sshll.u32 %s7, 4
      %s58 = int_to_ptr.hbm [resolvable:$true] %s57
      %s59 = sshll.u32 [#allocation7], 4
      %s60 = int_to_ptr.vmem [resolvable:$true] %s59
      %65 = dma.hbm_to_vmem [thread:$0]  %s58, 1024, %s60, [#allocation6], 64, 64, 4
    $region33: #{tpu_custom_call.1} parent=1 // pred_fallthru
      _
    // Predicated region
    $region34: #{tpu_custom_call.1} parent=1 // pred_check
      _
    $region35: #{tpu_custom_call.1} parent=1 // pred_check_branch
      %67 = sbr.rel (0) target = $region37
    $region36: #{tpu_custom_call.1} parent=1 // pred_region
      _
    $region37: #{tpu_custom_call.1} parent=1 // pred_fallthru
      _
    // Predicated region
    $region38: #{tpu_custom_call.1} parent=1 // pred_check
      _
    $region39: #{tpu_custom_call.1} parent=1 // pred_check_branch
      %69 = sbr.rel (0) target = $region41
    $region40: #{tpu_custom_call.1} parent=1 // pred_region
      %71 = dma.done [#allocation3], 128
    $region41: #{tpu_custom_call.1} parent=1 // pred_fallthru
      _
    // Predicated region
    $region42: #{tpu_custom_call.1} parent=1 // pred_check
      _
    $region43: #{tpu_custom_call.1} parent=1 // pred_check_branch
      %73 = sbr.rel (0) target = $region45
    $region44: #{tpu_custom_call.1} parent=1 // pred_region
      %75 = dma.done [#allocation6], 2048
    $region45: #{tpu_custom_call.1} parent=1 // pred_fallthru
      _
    // Predicated region
    $region46: #{tpu_custom_call.1} parent=1 // pred_check
      _
    $region47: #{tpu_custom_call.1} parent=1 // pred_check_branch
      %77 = sbr.rel (0) target = $region49
    $region48: #{tpu_custom_call.1} parent=1 // pred_region
      %79 = dma.done [#allocation6], 1024
    $region49: #{tpu_custom_call.1} parent=1 // pred_fallthru
      _
    %v81 = vld [vmem:[%s0] sm:$0xff]
    %v82 = vld [vmem:[%s1] sm:$0x1]
    %84 = vset.pattern.permute.xlu0 0
    %85 = vperm.xlu0 %84, %v81
    %v86 = vpop.permute.xlu0 %85
    %v89 = vperm.slane %v82, 0
    %v91 = vmul.f32 %v86, %v89
    %v92 = vand.u32 2147483647, %v91
    %vm93 = vcmp.le.f32.partialorder %v92, 0.7853982
    %vm94 = vcmp.lt.s32.totalorder %v91, 0
    %v95 = vand.u32 %v91, 2139095040
    %v96 = vshrl.u32 %v95, 23
    %v97 = vsub.s32 %v96, 127
    %v98 = vand.u32 2147483647, %v91
    %v99 = vand.u32 %v98, 8388607
    %v100 = vor.u32 %v99, 8388608
    %v101 = vsub.s32 0, %v100
    %v102 = vadd.s32 %v97, 1
    %vm103 = vcmp.gt.s32.totalorder %v102, 0
    %v104 = vsel %vm103, %v102, 0
    %v105 = vshrl.u32 %v104, 5
    %v106 = vand.u32 %v104, 31
    %v107 = vsub.s32 32, %v106
    %v108 = vshrl.u32 683565275, %v107
    %v109 = vshll.u32 683565275, %v106
    %v110 = vshrl.u32 2475754826, %v107
    %v111 = vor.u32 %v109, %v110
    %v112 = vshll.u32 2475754826, %v106
    %v113 = vshrl.u32 2131351028, %v107
    %v114 = vor.u32 %v112, %v113
    %v115 = vshll.u32 2131351028, %v106
    %v116 = vshrl.u32 2102212464, %v107
    %v117 = vor.u32 %v115, %v116
    %v118 = vshll.u32 2102212464, %v106
    %v119 = vshrl.u32 920167782, %v107
    %v120 = vor.u32 %v118, %v119
    %v121 = vshll.u32 920167782, %v106
    %v122 = vshrl.u32 1326507024, %v107
    %v123 = vor.u32 %v121, %v122
    %vm124 = vcmp.lt.s32.totalorder %v105, 1
    %vm125 = vcmp.lt.s32.totalorder %v105, 2
    %vm126 = vcmp.lt.s32.totalorder %v105, 3
    %vm127 = vcmp.lt.s32.totalorder %v105, 4
    %v128 = vsel %vm124, %v108, %v111
    %v129 = vsel %vm127, %v117, 2102212464
    %v130 = vsel %vm126, %v114, %v129
    %v131 = vsel %vm125, %v128, %v130
    %v132 = vsel %vm124, %v111, %v114
    %v133 = vsel %vm127, %v120, 920167782
    %v134 = vsel %vm126, %v117, %v133
    %v135 = vsel %vm125, %v132, %v134
    %v136 = vsel %vm124, %v114, %v117
    %v137 = vsel %vm127, %v123, 1326507024
    %v138 = vsel %vm126, %v120, %v137
    %v139 = vsel %vm125, %v136, %v138
    %v140 = vshll.u32 %v100, 8
    %v141 = vand.u32 %v140, 65535
    %v142 = vshrl.u32 %v140, 16
    %v143 = vand.u32 %v139, 65535
    %v144 = vshrl.u32 %v139, 16
    %v145 = vmul.u32 %v141, %v143
    %v146 = vmul.u32 %v141, %v144
    %v147 = vmul.u32 %v142, %v143
    %v148 = vmul.u32 %v142, %v144
    %v149 = vshll.u32 %v146, 16
    %v150 = vshrl.u32 %v146, 16
    %v151 = vshll.u32 %v147, 16
    %v152 = vshrl.u32 %v147, 16
    %vm153 = vc.u32 %v145, %v149
    %v154 = vsel %vm153, 1, 0
    %v155 = vadd.s32 %v145, %v149
    %v156 = vadd.s32 %v148, %v154
    %vm157 = vc.u32 %v155, %v151
    %v158 = vsel %vm157, 1, 0
    %v159 = vadd.s32 %v155, %v151
    %v160 = vadd.s32 %v156, %v158
    %v161 = vadd.s32 %v160, %v150
    %v162 = vadd.s32 %v161, %v152
    %v163 = vand.u32 %v140, 65535
    %v164 = vshrl.u32 %v140, 16
    %v165 = vand.u32 %v135, 65535
    %v166 = vshrl.u32 %v135, 16
    %v167 = vmul.u32 %v163, %v165
    %v168 = vmul.u32 %v163, %v166
    %v169 = vmul.u32 %v164, %v165
    %v170 = vmul.u32 %v164, %v166
    %v171 = vshll.u32 %v168, 16
    %v172 = vshrl.u32 %v168, 16
    %v173 = vshll.u32 %v169, 16
    %v174 = vshrl.u32 %v169, 16
    %vm175 = vc.u32 %v167, %v171
    %v176 = vsel %vm175, 1, 0
    %v177 = vadd.s32 %v167, %v171
    %v178 = vadd.s32 %v170, %v176
    %vm179 = vc.u32 %v177, %v173
    %v180 = vsel %vm179, 1, 0
    %v181 = vadd.s32 %v177, %v173
    %v182 = vadd.s32 %v178, %v180
    %v183 = vadd.s32 %v182, %v172
    %v184 = vadd.s32 %v183, %v174
    %v185 = vmul.u32 %v140, %v131
    %v186 = vadd.s32 %v162, %v181
    %vm187 = vc.u32 %v162, %v181
    %v188 = vadd.s32 %v184, 1
    %v189 = vsel %vm187, %v188, %v184
    %v190 = vadd.s32 %v185, %v189
    %v191 = vadd.s32 %v190, 536870912
    %v192 = vshrl.u32 %v191, 30
    %v193 = vshll.u32 %v192, 30
    %v194 = vsub.s32 %v190, %v193
    %vm195 = vcmp.lt.s32.totalorder %v194, 0
    %v196 = vsub.s32 0, %v194
    %v197 = vsel %vm195, %v196, %v194
    %v198 = vclz %v197
    %v199 = vsub.s32 %v198, 2
    %vm200 = vcmp.gt.s32.totalorder 0, %v199
    %v201 = vsel %vm200, 0, %v199
    %v202 = vsub.s32 32, %v201
    %v203 = vshll.u32 %v194, %v201
    %v204 = vshrl.u32 %v186, %v202
    %v205 = vor.u32 %v203, %v204
    %v206 = vsub.s32 4294967266, %v201
    %v207 = vadd.s32 %v206, 127
    %v208 = vshll.u32 %v207, 23
    %v209 = vor.u32 4788187, %v208
    %v210 = vand.u32 2147483647, %v209
    %v212 = vcvt.s32.f32 %v205
    %v213 = vmul.f32 %v212, %v210
    %v214 = vxor.u32 %v213, 2147483648
    %v215 = vsel %vm94, %v214, %v213
    %v216 = vsub.s32 4, %v192
    %v217 = vsel %vm94, %v216, %v192
    %v218 = vsel %vm93, %v91, %v215
    %v219 = vsel %vm93, 0, %v217
    %v220 = vmul.f32 %v218, %v218
    %v221 = vmul.f32 %v220, -0.001358992
    %v222 = vadd.f32 %v221, 0.041655596
    %v223 = vmul.f32 %v220, %v222
    %v224 = vadd.f32 %v223, -0.4999988
    %v225 = vmul.f32 %v220, %v224
    %v226 = vadd.f32 1.0, %v225
    %v227 = vmul.f32 %v218, %v218
    %v228 = vmul.f32 %v227, -0.00019511016
    %v229 = vadd.f32 %v228, 0.008332121
    %v230 = vmul.f32 %v227, %v229
    %v231 = vadd.f32 %v230, -0.16666654
    %v232 = vmul.f32 %v227, %v231
    %v233 = vadd.f32 %v232, 1.0
    %v234 = vmul.f32 %v233, %v218
    %vm235 = vweird.f32 %v91
    %v236 = vand.u32 %v219, 3
    %vm237 = vcmp.lt.s32.totalorder %v236, 2
    %vm238 = vcmp.eq.s32.totalorder %v236, 0
    %v239 = vxor.u32 %v234, 2147483648
    %v240 = vsel %vm238, %v226, %v239
    %vm241 = vcmp.eq.s32.totalorder %v236, 2
    %v242 = vxor.u32 %v226, 2147483648
    %v243 = vsel %vm241, %v242, %v234
    %v244 = vsel %vm237, %v240, %v243
    %v245 = vsel %vm235, nan, %v244
    %v246 = vand.u32 2147483647, %v91
    %vm247 = vcmp.le.f32.partialorder %v246, 0.7853982
    %vm248 = vcmp.lt.s32.totalorder %v91, 0
    %v249 = vand.u32 %v91, 2139095040
    %v250 = vshrl.u32 %v249, 23
    %v251 = vsub.s32 %v250, 127
    %v252 = vand.u32 2147483647, %v91
    %v253 = vand.u32 %v252, 8388607
    %v254 = vor.u32 %v253, 8388608
    %v255 = vsub.s32 0, %v254
    %v256 = vadd.s32 %v251, 1
    %vm257 = vcmp.gt.s32.totalorder %v256, 0
    %v258 = vsel %vm257, %v256, 0
    %v259 = vshrl.u32 %v258, 5
    %v260 = vand.u32 %v258, 31
    %v261 = vsub.s32 32, %v260
    %v262 = vshrl.u32 683565275, %v261
    %v263 = vshll.u32 683565275, %v260
    %v264 = vshrl.u32 2475754826, %v261
    %v265 = vor.u32 %v263, %v264
    %v266 = vshll.u32 2475754826, %v260
    %v267 = vshrl.u32 2131351028, %v261
    %v268 = vor.u32 %v266, %v267
    %v269 = vshll.u32 2131351028, %v260
    %v270 = vshrl.u32 2102212464, %v261
    %v271 = vor.u32 %v269, %v270
    %v272 = vshll.u32 2102212464, %v260
    %v273 = vshrl.u32 920167782, %v261
    %v274 = vor.u32 %v272, %v273
    %v275 = vshll.u32 920167782, %v260
    %v276 = vshrl.u32 1326507024, %v261
    %v277 = vor.u32 %v275, %v276
    %vm278 = vcmp.lt.s32.totalorder %v259, 1
    %vm279 = vcmp.lt.s32.totalorder %v259, 2
    %vm280 = vcmp.lt.s32.totalorder %v259, 3
    %vm281 = vcmp.lt.s32.totalorder %v259, 4
    %v282 = vsel %vm278, %v262, %v265
    %v283 = vsel %vm281, %v271, 2102212464
    %v284 = vsel %vm280, %v268, %v283
    %v285 = vsel %vm279, %v282, %v284
    %v286 = vsel %vm278, %v265, %v268
    %v287 = vsel %vm281, %v274, 920167782
    %v288 = vsel %vm280, %v271, %v287
    %v289 = vsel %vm279, %v286, %v288
    %v290 = vsel %vm278, %v268, %v271
    %v291 = vsel %vm281, %v277, 1326507024
    %v292 = vsel %vm280, %v274, %v291
    %v293 = vsel %vm279, %v290, %v292
    %v294 = vshll.u32 %v254, 8
    %v295 = vand.u32 %v294, 65535
    %v296 = vshrl.u32 %v294, 16
    %v297 = vand.u32 %v293, 65535
    %v298 = vshrl.u32 %v293, 16
    %v299 = vmul.u32 %v295, %v297
    %v300 = vmul.u32 %v295, %v298
    %v301 = vmul.u32 %v296, %v297
    %v302 = vmul.u32 %v296, %v298
    %v303 = vshll.u32 %v300, 16
    %v304 = vshrl.u32 %v300, 16
    %v305 = vshll.u32 %v301, 16
    %v306 = vshrl.u32 %v301, 16
    %vm307 = vc.u32 %v299, %v303
    %v308 = vsel %vm307, 1, 0
    %v309 = vadd.s32 %v299, %v303
    %v310 = vadd.s32 %v302, %v308
    %vm311 = vc.u32 %v309, %v305
    %v312 = vsel %vm311, 1, 0
    %v313 = vadd.s32 %v309, %v305
    %v314 = vadd.s32 %v310, %v312
    %v315 = vadd.s32 %v314, %v304
    %v316 = vadd.s32 %v315, %v306
    %v317 = vand.u32 %v294, 65535
    %v318 = vshrl.u32 %v294, 16
    %v319 = vand.u32 %v289, 65535
    %v320 = vshrl.u32 %v289, 16
    %v321 = vmul.u32 %v317, %v319
    %v322 = vmul.u32 %v317, %v320
    %v323 = vmul.u32 %v318, %v319
    %v324 = vmul.u32 %v318, %v320
    %v325 = vshll.u32 %v322, 16
    %v326 = vshrl.u32 %v322, 16
    %v327 = vshll.u32 %v323, 16
    %v328 = vshrl.u32 %v323, 16
    %vm329 = vc.u32 %v321, %v325
    %v330 = vsel %vm329, 1, 0
    %v331 = vadd.s32 %v321, %v325
    %v332 = vadd.s32 %v324, %v330
    %vm333 = vc.u32 %v331, %v327
    %v334 = vsel %vm333, 1, 0
    %v335 = vadd.s32 %v331, %v327
    %v336 = vadd.s32 %v332, %v334
    %v337 = vadd.s32 %v336, %v326
    %v338 = vadd.s32 %v337, %v328
    %v339 = vmul.u32 %v294, %v285
    %v340 = vadd.s32 %v316, %v335
    %vm341 = vc.u32 %v316, %v335
    %v342 = vadd.s32 %v338, 1
    %v343 = vsel %vm341, %v342, %v338
    %v344 = vadd.s32 %v339, %v343
    %v345 = vadd.s32 %v344, 536870912
    %v346 = vshrl.u32 %v345, 30
    %v347 = vshll.u32 %v346, 30
    %v348 = vsub.s32 %v344, %v347
    %vm349 = vcmp.lt.s32.totalorder %v348, 0
    %v350 = vsub.s32 0, %v348
    %v351 = vsel %vm349, %v350, %v348
    %v352 = vclz %v351
    %v353 = vsub.s32 %v352, 2
    %vm354 = vcmp.gt.s32.totalorder 0, %v353
    %v355 = vsel %vm354, 0, %v353
    %v356 = vsub.s32 32, %v355
    %v357 = vshll.u32 %v348, %v355
    %v358 = vshrl.u32 %v340, %v356
    %v359 = vor.u32 %v357, %v358
    %v360 = vsub.s32 4294967266, %v355
    %v361 = vadd.s32 %v360, 127
    %v362 = vshll.u32 %v361, 23
    %v363 = vor.u32 4788187, %v362
    %v364 = vand.u32 2147483647, %v363
    %v366 = vcvt.s32.f32 %v359
    %v367 = vmul.f32 %v366, %v364
    %v368 = vxor.u32 %v367, 2147483648
    %v369 = vsel %vm248, %v368, %v367
    %v370 = vsub.s32 4, %v346
    %v371 = vsel %vm248, %v370, %v346
    %v372 = vsel %vm247, %v91, %v369
    %v373 = vsel %vm247, 0, %v371
    %v374 = vmul.f32 %v372, %v372
    %v375 = vmul.f32 %v374, -0.001358992
    %v376 = vadd.f32 %v375, 0.041655596
    %v377 = vmul.f32 %v374, %v376
    %v378 = vadd.f32 %v377, -0.4999988
    %v379 = vmul.f32 %v374, %v378
    %v380 = vadd.f32 1.0, %v379
    %v381 = vmul.f32 %v372, %v372
    %v382 = vmul.f32 %v381, -0.00019511016
    %v383 = vadd.f32 %v382, 0.008332121
    %v384 = vmul.f32 %v381, %v383
    %v385 = vadd.f32 %v384, -0.16666654
    %v386 = vmul.f32 %v381, %v385
    %v387 = vadd.f32 %v386, 1.0
    %v388 = vmul.f32 %v387, %v372
    %vm389 = vweird.f32 %v91
    %v390 = vadd.s32 %v373, 3
    %v391 = vand.u32 %v390, 3
    %vm392 = vcmp.lt.s32.totalorder %v391, 2
    %vm393 = vcmp.eq.s32.totalorder %v391, 0
    %v394 = vxor.u32 %v388, 2147483648
    %v395 = vsel %vm393, %v380, %v394
    %vm396 = vcmp.eq.s32.totalorder %v391, 2
    %v397 = vxor.u32 %v380, 2147483648
    %v398 = vsel %vm396, %v397, %v388
    %v399 = vsel %vm392, %v395, %v398
    %v400 = vsel %vm389, nan, %v399
    %v401 = vpack.c.bf16 %v245, %v245
    %v402 = vpack.c.bf16 %v400, %v400
    %v403 = vld [vmem:[#allocation5] sm:$0xf]
    %v404 = vld [vmem:[#allocation5 + $0x4] sm:$0xf]
    %v405 = vld [vmem:[#allocation5 + $0x8] sm:$0xf]
    %v406 = vld [vmem:[#allocation5 + $0xc] sm:$0xf]
    %v407 = vld [vmem:[#allocation5 + $0x10] sm:$0xf]
    %v408 = vld [vmem:[#allocation5 + $0x14] sm:$0xf]
    %v409 = vld [vmem:[#allocation5 + $0x18] sm:$0xf]
    %v410 = vld [vmem:[#allocation5 + $0x1c] sm:$0xf]
    %v411 = vld [vmem:[#allocation5 + $0x20] sm:$0xf]
    %v412 = vld [vmem:[#allocation5 + $0x24] sm:$0xf]
    %v413 = vld [vmem:[#allocation5 + $0x28] sm:$0xf]
    %v414 = vld [vmem:[#allocation5 + $0x2c] sm:$0xf]
    %v415 = vld [vmem:[#allocation5 + $0x30] sm:$0xf]
    %v416 = vld [vmem:[#allocation5 + $0x34] sm:$0xf]
    %v417 = vld [vmem:[#allocation5 + $0x38] sm:$0xf]
    %v418 = vld [vmem:[#allocation5 + $0x3c] sm:$0xf]
    %v419 = vld [vmem:[#allocation5 + $0x40] sm:$0xf]
    %v420 = vld [vmem:[#allocation5 + $0x44] sm:$0xf]
    %v421 = vld [vmem:[#allocation5 + $0x48] sm:$0xf]
    %v422 = vld [vmem:[#allocation5 + $0x4c] sm:$0xf]
    %v423 = vld [vmem:[#allocation5 + $0x50] sm:$0xf]
    %v424 = vld [vmem:[#allocation5 + $0x54] sm:$0xf]
    %v425 = vld [vmem:[#allocation5 + $0x58] sm:$0xf]
    %v426 = vld [vmem:[#allocation5 + $0x5c] sm:$0xf]
    %v427 = vld [vmem:[#allocation5 + $0x60] sm:$0xf]
    %v428 = vld [vmem:[#allocation5 + $0x64] sm:$0xf]
    %v429 = vld [vmem:[#allocation5 + $0x68] sm:$0xf]
    %v430 = vld [vmem:[#allocation5 + $0x6c] sm:$0xf]
    %v431 = vld [vmem:[#allocation5 + $0x70] sm:$0xf]
    %v432 = vld [vmem:[#allocation5 + $0x74] sm:$0xf]
    %v433 = vld [vmem:[#allocation5 + $0x78] sm:$0xf]
    %v434 = vld [vmem:[#allocation5 + $0x7c] sm:$0xf]
    %v435 = vld [vmem:[%s6] sm:$0x1]
    %v437 = vperm.slane %v435, 0
    %v471 = vunpack.c.l.b16 %v403
    %v472 = vunpack.c.l.b16 %v404
    %v473 = vunpack.c.l.b16 %v405
    %v474 = vunpack.c.l.b16 %v406
    %v475 = vunpack.c.l.b16 %v407
    %v476 = vunpack.c.l.b16 %v408
    %v477 = vunpack.c.l.b16 %v409
    %v478 = vunpack.c.l.b16 %v410
    %v479 = vunpack.c.l.b16 %v411
    %v480 = vunpack.c.l.b16 %v412
    %v481 = vunpack.c.l.b16 %v413
    %v482 = vunpack.c.l.b16 %v414
    %v483 = vunpack.c.l.b16 %v415
    %v484 = vunpack.c.l.b16 %v416
    %v485 = vunpack.c.l.b16 %v417
    %v486 = vunpack.c.l.b16 %v418
    %v487 = vunpack.c.l.b16 %v419
    %v488 = vunpack.c.l.b16 %v420
    %v489 = vunpack.c.l.b16 %v421
    %v490 = vunpack.c.l.b16 %v422
    %v491 = vunpack.c.l.b16 %v423
    %v492 = vunpack.c.l.b16 %v424
    %v493 = vunpack.c.l.b16 %v425
    %v494 = vunpack.c.l.b16 %v426
    %v495 = vunpack.c.l.b16 %v427
    %v496 = vunpack.c.l.b16 %v428
    %v497 = vunpack.c.l.b16 %v429
    %v498 = vunpack.c.l.b16 %v430
    %v499 = vunpack.c.l.b16 %v431
    %v500 = vunpack.c.l.b16 %v432
    %v501 = vunpack.c.l.b16 %v433
    %v502 = vunpack.c.l.b16 %v434
    %v503 = vpack.c.b16 %v472, %v471
    %v504 = vpack.c.b16 %v474, %v473
    %v505 = vpack.c.b16 %v476, %v475
    %v506 = vpack.c.b16 %v478, %v477
    %v507 = vpack.c.b16 %v480, %v479
    %v508 = vpack.c.b16 %v482, %v481
    %v509 = vpack.c.b16 %v484, %v483
    %v510 = vpack.c.b16 %v486, %v485
    %v511 = vpack.c.b16 %v488, %v487
    %v512 = vpack.c.b16 %v490, %v489
    %v513 = vpack.c.b16 %v492, %v491
    %v514 = vpack.c.b16 %v494, %v493
    %v515 = vpack.c.b16 %v496, %v495
    %v516 = vpack.c.b16 %v498, %v497
    %v517 = vpack.c.b16 %v500, %v499
    %v518 = vpack.c.b16 %v502, %v501
    %535 = vmatpush.bf16.msra.mxu0 %v510
    %536 = vmatpush.bf16.msra.mxu0 %v509
    %537 = vmatpush.bf16.msra.mxu0 %v508
    %538 = vmatpush.bf16.msra.mxu0 %v507
    %539 = vmatpush.bf16.msra.mxu0 %v506
    %540 = vmatpush.bf16.msra.mxu0 %v505
    %541 = vmatpush.bf16.msra.mxu0 %v504
    %542 = vmatpush.bf16.msra.mxu0 %v503
    %543 = vmatmul.bf16.gmra.mxu0 %v401
    %v544 = vpop.f32.mrf.mxu0
    %v545 = vadd.f32 %v437, %v544
    %v546 = vpop.f32.mrf.mxu0
    %547 = vdwg.mxu0
    %548 = vmatpush.bf16.msra.mxu0 %v518
    %549 = vmatpush.bf16.msra.mxu0 %v517
    %550 = vmatpush.bf16.msra.mxu0 %v516
    %551 = vmatpush.bf16.msra.mxu0 %v515
    %552 = vmatpush.bf16.msra.mxu0 %v514
    %553 = vmatpush.bf16.msra.mxu0 %v513
    %554 = vmatpush.bf16.msra.mxu0 %v512
    %555 = vmatpush.bf16.msra.mxu0 %v511
    %556 = vmatmul.bf16.gmra.mxu0 %v402
    %v557 = vpop.f32.mrf.mxu0
    %v558 = vadd.f32 %v545, %v557
    %v559 = vpop.f32.mrf.mxu0
    %560 = vdwg.mxu0
    %v561 = vxor.u32 %v558, 2147483648
    %v562 = vmul.f32 %v561, 1.442695
    %v563 = vpow.pop %v562
    %v564 = vadd.f32 %v563, 1.0
    %v565 = vrcp.pop %v564
    %v566 = vmul.f32 %v564, %v565
    %v567 = vsub.f32 1.0, %v566
    %v568 = vmul.f32 %v565, %v567
    %v569 = vadd.f32 %v565, %v568
    %vm570 = vweird.f32 %v564
    %vm571 = vweird.f32 %v565
    %vm572 = vmor %vm570, %vm571
    %v573 = vsel %vm572, %v565, %v569
    %v574 = vand.u32 2147483647, %v564
    %vm575 = vcmp.eq.f32.partialorder %v574, 8.507059e+37
    %v576 = vand.u32 %v564, 2147483648
    %v577 = vor.u32 1.1754944e-38, %v576
    %v578 = vsel %vm575, %v577, %v573
    %v579 = vmul.f32 1.0, %v578
    %v580 = vmul.f32 %v558, %v579
    %v581 = vpack.c.bf16 %v580, %v580
    %v582 = vld [vmem:[#allocation7] sm:$0xf]
    %v583 = vld [vmem:[#allocation7 + $0x4] sm:$0xf]
    %v584 = vld [vmem:[#allocation7 + $0x8] sm:$0xf]
    %v585 = vld [vmem:[#allocation7 + $0xc] sm:$0xf]
    %v586 = vld [vmem:[#allocation7 + $0x10] sm:$0xf]
    %v587 = vld [vmem:[#allocation7 + $0x14] sm:$0xf]
    %v588 = vld [vmem:[#allocation7 + $0x18] sm:$0xf]
    %v589 = vld [vmem:[#allocation7 + $0x1c] sm:$0xf]
    %v590 = vld [vmem:[#allocation7 + $0x20] sm:$0xf]
    %v591 = vld [vmem:[#allocation7 + $0x24] sm:$0xf]
    %v592 = vld [vmem:[#allocation7 + $0x28] sm:$0xf]
    %v593 = vld [vmem:[#allocation7 + $0x2c] sm:$0xf]
    %v594 = vld [vmem:[#allocation7 + $0x30] sm:$0xf]
    %v595 = vld [vmem:[#allocation7 + $0x34] sm:$0xf]
    %v596 = vld [vmem:[#allocation7 + $0x38] sm:$0xf]
    %v597 = vld [vmem:[#allocation7 + $0x3c] sm:$0xf]
    %v598 = vld [vmem:[%s8] sm:$0x1]
    %v600 = vperm.slane %v598, 0
    %v618 = vunpack.c.l.b16 %v582
    %v619 = vunpack.c.l.b16 %v583
    %v620 = vunpack.c.l.b16 %v584
    %v621 = vunpack.c.l.b16 %v585
    %v622 = vunpack.c.l.b16 %v586
    %v623 = vunpack.c.l.b16 %v587
    %v624 = vunpack.c.l.b16 %v588
    %v625 = vunpack.c.l.b16 %v589
    %v626 = vunpack.c.l.b16 %v590
    %v627 = vunpack.c.l.b16 %v591
    %v628 = vunpack.c.l.b16 %v592
    %v629 = vunpack.c.l.b16 %v593
    %v630 = vunpack.c.l.b16 %v594
    %v631 = vunpack.c.l.b16 %v595
    %v632 = vunpack.c.l.b16 %v596
    %v633 = vunpack.c.l.b16 %v597
    %v634 = vpack.c.b16 %v619, %v618
    %v635 = vpack.c.b16 %v621, %v620
    %v636 = vpack.c.b16 %v623, %v622
    %v637 = vpack.c.b16 %v625, %v624
    %v638 = vpack.c.b16 %v627, %v626
    %v639 = vpack.c.b16 %v629, %v628
    %v640 = vpack.c.b16 %v631, %v630
    %v641 = vpack.c.b16 %v633, %v632
    %650 = vmatpush.bf16.msra.mxu0 %v641
    %651 = vmatpush.bf16.msra.mxu0 %v640
    %652 = vmatpush.bf16.msra.mxu0 %v639
    %653 = vmatpush.bf16.msra.mxu0 %v638
    %654 = vmatpush.bf16.msra.mxu0 %v637
    %655 = vmatpush.bf16.msra.mxu0 %v636
    %656 = vmatpush.bf16.msra.mxu0 %v635
    %657 = vmatpush.bf16.msra.mxu0 %v634
    %658 = vmatmul.bf16.gmra.mxu0 %v581
    %v659 = vpop.f32.mrf.mxu0
    %v660 = vadd.f32 %v600, %v659
    %v661 = vpop.f32.mrf.mxu0
    %662 = vdwg.mxu0
    %v663 = vld [vmem:[%s2] sm:$0xff]
    %v664 = vpack.c.bf16 %v663, %v663
    %v665 = vld [vmem:[#allocation2] sm:$0xf]
    %v666 = vld [vmem:[#allocation2 + $0x4] sm:$0xf]
    %v667 = vld [vmem:[%s4] sm:$0x1]
    %v669 = vperm.slane %v667, 0
    %v673 = vunpack.c.l.b16 %v665
    %v674 = vunpack.c.l.b16 %v666
    %v675 = vpack.c.b16 %v674, %v673
    %vm677 = vcmask 130048
    %v679 = vsel %vm677, %v664, 0
    %681 = vmatpush.bf16.msra.mxu0 0
    %682 = vmatpush.bf16.msra.mxu0 0
    %683 = vmatpush.bf16.msra.mxu0 0
    %684 = vmatpush.bf16.msra.mxu0 0
    %685 = vmatpush.bf16.msra.mxu0 0
    %686 = vmatpush.bf16.msra.mxu0 0
    %687 = vmatpush.bf16.msra.mxu0 0
    %688 = vmatpush.bf16.msra.mxu0 %v675
    %689 = vmatmul.bf16.gmra.mxu0 %v679
    %v690 = vpop.f32.mrf.mxu0
    %v691 = vadd.f32 %v669, %v690
    %v692 = vpop.f32.mrf.mxu0
    %693 = vdwg.mxu0
    %v694 = vmul.f32 %v660, %v691
    %695 = vst [vmem:[#allocation8] sm:$0xff] %v694
    // Predicated region
    $region50: #{tpu_custom_call.1} parent=1 // pred_check
      _
    $region51: #{tpu_custom_call.1} parent=1 // pred_check_branch
      %697 = sbr.rel (0) target = $region53
    $region52: #{tpu_custom_call.1} parent=1 // pred_region
      %699 = vsyncadd [#allocation4], 0
      %s701 = sshll.u32 [#allocation8], 4
      %s702 = int_to_ptr.vmem [resolvable:$true] %s701
      %s703 = sshll.u32 %s9, 4
      %s704 = int_to_ptr.hbm [resolvable:$true] %s703
      %706 = dma.vmem_to_hbm [thread:$0]  %s702, 128, %s704, [#allocation4]
    $region53: #{tpu_custom_call.1} parent=1 // pred_fallthru
      _
    // Predicated region
    $region54: #{tpu_custom_call.1} parent=1 // pred_check
      _
    $region55: #{tpu_custom_call.1} parent=1 // pred_check_branch
      %708 = sbr.rel (0) target = $region57
    $region56: #{tpu_custom_call.1} parent=1 // pred_region
      %710 = dma.done [#allocation4], 128
    $region57: #{tpu_custom_call.1} parent=1 // pred_fallthru
      _
    %711 = vsyncpa [#allocation3], 1
    %712 = vsyncpa [#allocation6], 1
    %713 = vsyncpa [#allocation4], 1

</llo_original>
